<compile_context>
chip_gen: v7x
topology: tpu7x:2x2x1
jax: 0.10.0
libtpu: 0.0.40
codegen_flags: <defaults>
</compile_context>

<pallas_src>
import functools

import numpy as np

import jax
import jax.numpy as jnp
from jax.experimental import pallas as pl
from jax.experimental.pallas import tpu as pltpu


def _dc_kernel(noise_lvl, x_ref, k0_ref, m_ref, fx_ref, fy_ref, o_ref):
    """One grid step: FFT2 -> data consistency -> iFFT2 for a block of images."""
    f32 = jnp.float32
    dot = lambda a, b: jnp.dot(a, b, preferred_element_type=f32)

    # Constant DFT matrices; index_map is constant so they are fetched once.
    fxr, fxi, fxs, fxd = fx_ref[0], fx_ref[1], fx_ref[2], fx_ref[3]
    fyr, fyi, fys, fyd = fy_ref[0], fy_ref[1], fy_ref[2], fy_ref[3]

    if noise_lvl:  # static Python branch (noise_lvl baked in at trace time)
        v = float(noise_lvl)
        inv = 1.0 / (1.0 + v)

    bb = x_ref.shape[0]
    for b in range(bb):  # small static unroll over the batch block
        xr = x_ref[b, 0]
        xi = x_ref[b, 1]

        # ---- forward FFT2 (ortho): K = F_x @ X @ F_y, Karatsuba per stage ----
        m1 = dot(fxr, xr)
        m2 = dot(fxi, xi)
        m3 = dot(fxs, xr + xi)          # fxs = fxr + fxi (precomputed)
        tr = m1 - m2
        ti = m3 - m1 - m2

        n1 = dot(tr, fyr)
        n2 = dot(ti, fyi)
        n3 = dot(tr + ti, fys)          # fys = fyr + fyi
        kr = n1 - n2
        ki = n3 - n1 - n2

        # ---- data consistency (mask shared by real/imag channels) ----
        msk = m_ref[b, 0]
        k0r = k0_ref[b, 0]
        k0i = k0_ref[b, 1]
        if noise_lvl:
            dcr = kr + msk * ((kr + v * k0r) * inv - kr)
            dci = ki + msk * ((ki + v * k0i) * inv - ki)
        else:
            dcr = kr + msk * (k0r - kr)
            dci = ki + msk * (k0i - ki)

        # ---- inverse FFT2 (ortho): X = conj(F_x) @ Kdc @ conj(F_y) ----
        p1 = dot(fxr, dcr)
        p2 = dot(fxi, dci)
        p3 = dot(fxd, dcr + dci)        # fxd = fxr - fxi
        ur = p1 + p2
        ui = p3 - p1 + p2

        q1 = dot(ur, fyr)
        q2 = dot(ui, fyi)
        q3 = dot(ur + ui, fyd)          # fyd = fyr - fyi
        o_ref[b, 0] = (q1 + q2).astype(o_ref.dtype)
        o_ref[b, 1] = (q3 - q1 + q2).astype(o_ref.dtype)


@functools.lru_cache(maxsize=None)
def _dft_pack(n):
    """Ortho DFT matrix of size n packed as [real, imag, real+imag, real-imag]."""
    idx = np.arange(n)
    ang = -2.0 * np.pi * np.outer(idx, idx) / n
    scale = 1.0 / np.sqrt(n)
    fr = np.cos(ang) * scale
    fi = np.sin(ang) * scale
    pack = np.stack([fr, fi, fr + fi, fr - fi]).astype(np.float32)
    return jnp.asarray(pack)


def _pick_batch_block(n, nx, ny):
    """Images per grid step: enough plane work per step, keep >=2 steps if possible."""
    target = max(1, 65536 // max(1, nx * ny))
    bb = max(1, min(n, target))
    while bb > 1 and n // bb < 2:   # leave >=2 grid steps for megacore parts
        bb -= 1
    while n % bb:                   # grid must tile the batch exactly
        bb -= 1
    return bb


def data_consistency_in_kspace(x, k0, mask, noise_lvl=None):
    """x, k0: (n, 2, nx, ny); mask: (n, 1|2, nx, ny).  Returns (n, 2, nx, ny) f32.

    Real/imag channels of `mask` are assumed identical (true for the PyTorch
    module's usage); only channel 0 is read by the kernel.
    """
    # noise_lvl selects a compile-time branch (as `if v:` does in PyTorch).
    assert noise_lvl is None or isinstance(noise_lvl, (int, float)), \
        "noise_lvl must be a static Python number or None"
    # TODO(synk): 5-D (n, 2, nx, ny, nt) inputs are not handled here; fold nt
    # into the batch axis before calling if needed.
    n, c, nx, ny = x.shape
    assert c == 2 and k0.shape == x.shape and mask.shape[0] == n

    x = x.astype(jnp.float32)
    k0 = k0.astype(jnp.float32)
    mask = mask.astype(jnp.float32)

    fx = _dft_pack(nx)
    fy = _dft_pack(ny)
    bb = _pick_batch_block(n, nx, ny)

    data_spec = pl.BlockSpec((bb, 2, nx, ny), lambda i: (i, 0, 0, 0))
    mask_spec = pl.BlockSpec((bb, 1, nx, ny), lambda i: (i, 0, 0, 0))  # ch 0 only
    fx_spec = pl.BlockSpec((4, nx, nx), lambda i: (0, 0, 0))
    fy_spec = pl.BlockSpec((4, ny, ny), lambda i: (0, 0, 0))

    # Explicit VMEM budget: default scoped limits (16 MiB v5e / 32 MiB v6e,v7x)
    # are tight for large planes; cap at 64 MiB (v7x physical VMEM per core).
    plane = nx * ny * 4
    block_bytes = bb * 7 * plane                    # x, k0, out (2ch) + mask (1ch)
    const_bytes = 4 * (nx * nx + ny * ny) * 4
    interm_bytes = bb * 12 * plane                  # Karatsuba temporaries
    est = 2 * (block_bytes + const_bytes) + interm_bytes
    vmem_limit = int(min(max(2 * est, 32 * 1024 * 1024), 64 * 1024 * 1024))

    flops = 12 * n * (nx * nx * ny + nx * ny * ny)  # 12 real matmuls / image
    bytes_accessed = 7 * n * plane + const_bytes

    kernel = functools.partial(_dc_kernel, noise_lvl)
    return pl.pallas_call(
        kernel,
        out_shape=jax.ShapeDtypeStruct((n, 2, nx, ny), jnp.float32),
        grid_spec=pltpu.PrefetchScalarGridSpec(
            num_scalar_prefetch=0,
            grid=(n // bb,),
            in_specs=[data_spec, data_spec, mask_spec, fx_spec, fy_spec],
            out_specs=data_spec,
        ),
        compiler_params=pltpu.CompilerParams(
            dimension_semantics=("parallel",),
            vmem_limit_bytes=vmem_limit,
        ),
        cost_estimate=pl.CostEstimate(
            flops=flops, transcendentals=0, bytes_accessed=bytes_accessed),
    )(x, k0, mask, fx, fy)


if __name__ == "__main__":
    key = jax.random.PRNGKey(0)
    n, nx, ny = 2, 16, 16
    k1, k2, k3 = jax.random.split(key, 3)

    x = jax.random.normal(k1, (n, 2, nx, ny), dtype=jnp.float32)
    k0 = jax.random.normal(k2, (n, 2, nx, ny), dtype=jnp.float32)
    # binary undersampling mask, identical across real/imag channels
    m2d = (jax.random.uniform(k3, (n, 1, nx, ny)) > 0.5).astype(jnp.float32)
    mask = jnp.broadcast_to(m2d, (n, 2, nx, ny)).astype(jnp.float32)

    def ref_fn(x, k0, mask, noise_lvl=None):
        xc = x[:, 0] + 1j * x[:, 1]
        k = jnp.fft.fft2(xc, norm="ortho")
        k_ri = jnp.stack([k.real, k.imag], axis=1)
        if noise_lvl:
            v = noise_lvl
            k_dc = (1.0 - mask) * k_ri + mask * (k_ri + v * k0) / (1.0 + v)
        else:
            k_dc = (1.0 - mask) * k_ri + mask * k0
        kc = k_dc[:, 0] + 1j * k_dc[:, 1]
        xres = jnp.fft.ifft2(kc, norm="ortho")
        return jnp.stack([xres.real, xres.imag], axis=1).astype(jnp.float32)

    out = jax.block_until_ready(data_consistency_in_kspace(x, k0, mask))
    assert out.shape == (n, 2, nx, ny)
    assert jnp.allclose(out, ref_fn(x, k0, mask), atol=1e-4, rtol=1e-4), \
        "mismatch vs FFT reference (noise_lvl=None)"

    out_n = jax.block_until_ready(
        data_consistency_in_kspace(x, k0, mask, noise_lvl=0.05))
    assert jnp.allclose(out_n, ref_fn(x, k0, mask, 0.05), atol=1e-4, rtol=1e-4), \
        "mismatch vs FFT reference (noise_lvl=0.05)"

    print("KERNEL_OK")
</pallas_src>

<mosaic_0001>
module attributes {stable_mosaic.version = 11 : i64} {
  func.func @_dc_kernel(%arg0: i32, %arg1: memref<1x2x16x16xf32, #tpu.memory_space<vmem>>, %arg2: memref<1x2x16x16xf32, #tpu.memory_space<vmem>>, %arg3: memref<1x1x16x16xf32, #tpu.memory_space<vmem>>, %arg4: memref<4x16x16xf32, #tpu.memory_space<vmem>>, %arg5: memref<4x16x16xf32, #tpu.memory_space<vmem>>, %arg6: memref<1x2x16x16xf32, #tpu.memory_space<vmem>>) attributes {dimension_semantics = [#tpu.dimension_semantics<parallel>], iteration_bounds = array<i64: 2>, scalar_prefetch = 0 : i64, scratch_operands = 0 : i64, tpu.core_type = #tpu.core_type<tc>, window_params = [{transform_indices = @transform_0, window_bounds = array<i64: 1, 2, 16, 16>}, {transform_indices = @transform_1, window_bounds = array<i64: 1, 2, 16, 16>}, {transform_indices = @transform_2, window_bounds = array<i64: 1, 1, 16, 16>}, {pipeline_mode = #tpu.pipeline_mode<synchronous>, transform_indices = @transform_3, window_bounds = array<i64: 4, 16, 16>}, {pipeline_mode = #tpu.pipeline_mode<synchronous>, transform_indices = @transform_4, window_bounds = array<i64: 4, 16, 16>}, {transform_indices = @transform_5, window_bounds = array<i64: 1, 2, 16, 16>}]} {
    %c0 = arith.constant 0 : index
    %c0_0 = arith.constant 0 : index
    %c0_1 = arith.constant 0 : index
    %0 = vector.load %arg4[%c0, %c0_0, %c0_1] : memref<4x16x16xf32, #tpu.memory_space<vmem>>, vector<1x16x16xf32>
    %1 = vector.shape_cast %0 : vector<1x16x16xf32> to vector<16x16xf32>
    %c1 = arith.constant 1 : index
    %c0_2 = arith.constant 0 : index
    %c0_3 = arith.constant 0 : index
    %2 = vector.load %arg4[%c1, %c0_2, %c0_3] : memref<4x16x16xf32, #tpu.memory_space<vmem>>, vector<1x16x16xf32>
    %3 = vector.shape_cast %2 : vector<1x16x16xf32> to vector<16x16xf32>
    %c2 = arith.constant 2 : index
    %c0_4 = arith.constant 0 : index
    %c0_5 = arith.constant 0 : index
    %4 = vector.load %arg4[%c2, %c0_4, %c0_5] : memref<4x16x16xf32, #tpu.memory_space<vmem>>, vector<1x16x16xf32>
    %5 = vector.shape_cast %4 : vector<1x16x16xf32> to vector<16x16xf32>
    %c3 = arith.constant 3 : index
    %c0_6 = arith.constant 0 : index
    %c0_7 = arith.constant 0 : index
    %6 = vector.load %arg4[%c3, %c0_6, %c0_7] : memref<4x16x16xf32, #tpu.memory_space<vmem>>, vector<1x16x16xf32>
    %7 = vector.shape_cast %6 : vector<1x16x16xf32> to vector<16x16xf32>
    %c0_8 = arith.constant 0 : index
    %c0_9 = arith.constant 0 : index
    %c0_10 = arith.constant 0 : index
    %8 = vector.load %arg5[%c0_8, %c0_9, %c0_10] : memref<4x16x16xf32, #tpu.memory_space<vmem>>, vector<1x16x16xf32>
    %9 = vector.shape_cast %8 : vector<1x16x16xf32> to vector<16x16xf32>
    %c1_11 = arith.constant 1 : index
    %c0_12 = arith.constant 0 : index
    %c0_13 = arith.constant 0 : index
    %10 = vector.load %arg5[%c1_11, %c0_12, %c0_13] : memref<4x16x16xf32, #tpu.memory_space<vmem>>, vector<1x16x16xf32>
    %11 = vector.shape_cast %10 : vector<1x16x16xf32> to vector<16x16xf32>
    %c2_14 = arith.constant 2 : index
    %c0_15 = arith.constant 0 : index
    %c0_16 = arith.constant 0 : index
    %12 = vector.load %arg5[%c2_14, %c0_15, %c0_16] : memref<4x16x16xf32, #tpu.memory_space<vmem>>, vector<1x16x16xf32>
    %13 = vector.shape_cast %12 : vector<1x16x16xf32> to vector<16x16xf32>
    %c3_17 = arith.constant 3 : index
    %c0_18 = arith.constant 0 : index
    %c0_19 = arith.constant 0 : index
    %14 = vector.load %arg5[%c3_17, %c0_18, %c0_19] : memref<4x16x16xf32, #tpu.memory_space<vmem>>, vector<1x16x16xf32>
    %15 = vector.shape_cast %14 : vector<1x16x16xf32> to vector<16x16xf32>
    %c0_20 = arith.constant 0 : index
    %c0_21 = arith.constant 0 : index
    %c0_22 = arith.constant 0 : index
    %c0_23 = arith.constant 0 : index
    %16 = vector.load %arg1[%c0_20, %c0_21, %c0_22, %c0_23] : memref<1x2x16x16xf32, #tpu.memory_space<vmem>>, vector<1x1x16x16xf32>
    %17 = vector.shape_cast %16 : vector<1x1x16x16xf32> to vector<16x16xf32>
    %c0_24 = arith.constant 0 : index
    %c1_25 = arith.constant 1 : index
    %c0_26 = arith.constant 0 : index
    %c0_27 = arith.constant 0 : index
    %18 = vector.load %arg1[%c0_24, %c1_25, %c0_26, %c0_27] : memref<1x2x16x16xf32, #tpu.memory_space<vmem>>, vector<1x1x16x16xf32>
    %19 = vector.shape_cast %18 : vector<1x1x16x16xf32> to vector<16x16xf32>
    %cst = arith.constant dense<0.000000e+00> : vector<16x16xf32>
    %20 = tpu.matmul %1, %17, %cst {dimension_numbers = #tpu.dot_dimension_numbers<[1], [0], [0], [1], [0, 0, 1, 1], [], []>} : vector<16x16xf32>, vector<16x16xf32>, vector<16x16xf32> -> vector<16x16xf32>
    %cst_28 = arith.constant dense<0.000000e+00> : vector<16x16xf32>
    %21 = tpu.matmul %3, %19, %cst_28 {dimension_numbers = #tpu.dot_dimension_numbers<[1], [0], [0], [1], [0, 0, 1, 1], [], []>} : vector<16x16xf32>, vector<16x16xf32>, vector<16x16xf32> -> vector<16x16xf32>
    %22 = arith.addf %17, %19 : vector<16x16xf32>
    %cst_29 = arith.constant dense<0.000000e+00> : vector<16x16xf32>
    %23 = tpu.matmul %5, %22, %cst_29 {dimension_numbers = #tpu.dot_dimension_numbers<[1], [0], [0], [1], [0, 0, 1, 1], [], []>} : vector<16x16xf32>, vector<16x16xf32>, vector<16x16xf32> -> vector<16x16xf32>
    %24 = arith.subf %20, %21 : vector<16x16xf32>
    %25 = arith.subf %23, %20 : vector<16x16xf32>
    %26 = arith.subf %25, %21 : vector<16x16xf32>
    %cst_30 = arith.constant dense<0.000000e+00> : vector<16x16xf32>
    %27 = tpu.matmul %24, %9, %cst_30 {dimension_numbers = #tpu.dot_dimension_numbers<[1], [0], [0], [1], [0, 0, 1, 1], [], []>} : vector<16x16xf32>, vector<16x16xf32>, vector<16x16xf32> -> vector<16x16xf32>
    %cst_31 = arith.constant dense<0.000000e+00> : vector<16x16xf32>
    %28 = tpu.matmul %26, %11, %cst_31 {dimension_numbers = #tpu.dot_dimension_numbers<[1], [0], [0], [1], [0, 0, 1, 1], [], []>} : vector<16x16xf32>, vector<16x16xf32>, vector<16x16xf32> -> vector<16x16xf32>
    %29 = arith.addf %24, %26 : vector<16x16xf32>
    %cst_32 = arith.constant dense<0.000000e+00> : vector<16x16xf32>
    %30 = tpu.matmul %29, %13, %cst_32 {dimension_numbers = #tpu.dot_dimension_numbers<[1], [0], [0], [1], [0, 0, 1, 1], [], []>} : vector<16x16xf32>, vector<16x16xf32>, vector<16x16xf32> -> vector<16x16xf32>
    %31 = arith.subf %27, %28 : vector<16x16xf32>
    %32 = arith.subf %30, %27 : vector<16x16xf32>
    %33 = arith.subf %32, %28 : vector<16x16xf32>
    %c0_33 = arith.constant 0 : index
    %c0_34 = arith.constant 0 : index
    %c0_35 = arith.constant 0 : index
    %c0_36 = arith.constant 0 : index
    %34 = vector.load %arg3[%c0_33, %c0_34, %c0_35, %c0_36] : memref<1x1x16x16xf32, #tpu.memory_space<vmem>>, vector<1x1x16x16xf32>
    %35 = vector.shape_cast %34 : vector<1x1x16x16xf32> to vector<16x16xf32>
    %c0_37 = arith.constant 0 : index
    %c0_38 = arith.constant 0 : index
    %c0_39 = arith.constant 0 : index
    %c0_40 = arith.constant 0 : index
    %36 = vector.load %arg2[%c0_37, %c0_38, %c0_39, %c0_40] : memref<1x2x16x16xf32, #tpu.memory_space<vmem>>, vector<1x1x16x16xf32>
    %37 = vector.shape_cast %36 : vector<1x1x16x16xf32> to vector<16x16xf32>
    %c0_41 = arith.constant 0 : index
    %c1_42 = arith.constant 1 : index
    %c0_43 = arith.constant 0 : index
    %c0_44 = arith.constant 0 : index
    %38 = vector.load %arg2[%c0_41, %c1_42, %c0_43, %c0_44] : memref<1x2x16x16xf32, #tpu.memory_space<vmem>>, vector<1x1x16x16xf32>
    %39 = vector.shape_cast %38 : vector<1x1x16x16xf32> to vector<16x16xf32>
    %40 = arith.subf %37, %31 : vector<16x16xf32>
    %41 = arith.mulf %35, %40 : vector<16x16xf32>
    %42 = arith.addf %31, %41 : vector<16x16xf32>
    %43 = arith.subf %39, %33 : vector<16x16xf32>
    %44 = arith.mulf %35, %43 : vector<16x16xf32>
    %45 = arith.addf %33, %44 : vector<16x16xf32>
    %cst_45 = arith.constant dense<0.000000e+00> : vector<16x16xf32>
    %46 = tpu.matmul %1, %42, %cst_45 {dimension_numbers = #tpu.dot_dimension_numbers<[1], [0], [0], [1], [0, 0, 1, 1], [], []>} : vector<16x16xf32>, vector<16x16xf32>, vector<16x16xf32> -> vector<16x16xf32>
    %cst_46 = arith.constant dense<0.000000e+00> : vector<16x16xf32>
    %47 = tpu.matmul %3, %45, %cst_46 {dimension_numbers = #tpu.dot_dimension_numbers<[1], [0], [0], [1], [0, 0, 1, 1], [], []>} : vector<16x16xf32>, vector<16x16xf32>, vector<16x16xf32> -> vector<16x16xf32>
    %48 = arith.addf %42, %45 : vector<16x16xf32>
    %cst_47 = arith.constant dense<0.000000e+00> : vector<16x16xf32>
    %49 = tpu.matmul %7, %48, %cst_47 {dimension_numbers = #tpu.dot_dimension_numbers<[1], [0], [0], [1], [0, 0, 1, 1], [], []>} : vector<16x16xf32>, vector<16x16xf32>, vector<16x16xf32> -> vector<16x16xf32>
    %50 = arith.addf %46, %47 : vector<16x16xf32>
    %51 = arith.subf %49, %46 : vector<16x16xf32>
    %52 = arith.addf %51, %47 : vector<16x16xf32>
    %cst_48 = arith.constant dense<0.000000e+00> : vector<16x16xf32>
    %53 = tpu.matmul %50, %9, %cst_48 {dimension_numbers = #tpu.dot_dimension_numbers<[1], [0], [0], [1], [0, 0, 1, 1], [], []>} : vector<16x16xf32>, vector<16x16xf32>, vector<16x16xf32> -> vector<16x16xf32>
    %cst_49 = arith.constant dense<0.000000e+00> : vector<16x16xf32>
    %54 = tpu.matmul %52, %11, %cst_49 {dimension_numbers = #tpu.dot_dimension_numbers<[1], [0], [0], [1], [0, 0, 1, 1], [], []>} : vector<16x16xf32>, vector<16x16xf32>, vector<16x16xf32> -> vector<16x16xf32>
    %55 = arith.addf %50, %52 : vector<16x16xf32>
    %cst_50 = arith.constant dense<0.000000e+00> : vector<16x16xf32>
    %56 = tpu.matmul %55, %15, %cst_50 {dimension_numbers = #tpu.dot_dimension_numbers<[1], [0], [0], [1], [0, 0, 1, 1], [], []>} : vector<16x16xf32>, vector<16x16xf32>, vector<16x16xf32> -> vector<16x16xf32>
    %57 = arith.addf %53, %54 : vector<16x16xf32>
    %c0_51 = arith.constant 0 : index
    %c0_52 = arith.constant 0 : index
    %c0_53 = arith.constant 0 : index
    %c0_54 = arith.constant 0 : index
    %58 = vector.load %arg6[%c0_51, %c0_52, %c0_53, %c0_54] : memref<1x2x16x16xf32, #tpu.memory_space<vmem>>, vector<1x1x16x16xf32>
    %59 = vector.shape_cast %58 : vector<1x1x16x16xf32> to vector<16x16xf32>
    %60 = vector.shape_cast %57 : vector<16x16xf32> to vector<1x1x16x16xf32>
    tpu.vector_store %arg6[%c0_51, %c0_52, %c0_53, %c0_54], %60 {strides = array<i32>} : memref<1x2x16x16xf32, #tpu.memory_space<vmem>>, vector<1x1x16x16xf32>,
    %61 = arith.subf %56, %53 : vector<16x16xf32>
    %62 = arith.addf %61, %54 : vector<16x16xf32>
    %c0_55 = arith.constant 0 : index
    %c1_56 = arith.constant 1 : index
    %c0_57 = arith.constant 0 : index
    %c0_58 = arith.constant 0 : index
    %63 = vector.load %arg6[%c0_55, %c1_56, %c0_57, %c0_58] : memref<1x2x16x16xf32, #tpu.memory_space<vmem>>, vector<1x1x16x16xf32>
    %64 = vector.shape_cast %63 : vector<1x1x16x16xf32> to vector<16x16xf32>
    %65 = vector.shape_cast %62 : vector<16x16xf32> to vector<1x1x16x16xf32>
    tpu.vector_store %arg6[%c0_55, %c1_56, %c0_57, %c0_58], %65 {strides = array<i32>} : memref<1x2x16x16xf32, #tpu.memory_space<vmem>>, vector<1x1x16x16xf32>,
    return
  }
  func.func @transform_0(%arg0: i32) -> (i32, i32, i32, i32) {
    %c0_i32 = arith.constant 0 : i32
    %c0_i32_0 = arith.constant 0 : i32
    %c0_i32_1 = arith.constant 0 : i32
    %c0_i32_2 = arith.constant 0 : i32
    return %arg0, %c0_i32, %c0_i32_0, %c0_i32_1 : i32, i32, i32, i32
  }
  func.func @transform_1(%arg0: i32) -> (i32, i32, i32, i32) {
    %c0_i32 = arith.constant 0 : i32
    %c0_i32_0 = arith.constant 0 : i32
    %c0_i32_1 = arith.constant 0 : i32
    %c0_i32_2 = arith.constant 0 : i32
    return %arg0, %c0_i32, %c0_i32_0, %c0_i32_1 : i32, i32, i32, i32
  }
  func.func @transform_2(%arg0: i32) -> (i32, i32, i32, i32) {
    %c0_i32 = arith.constant 0 : i32
    %c0_i32_0 = arith.constant 0 : i32
    %c0_i32_1 = arith.constant 0 : i32
    %c0_i32_2 = arith.constant 0 : i32
    return %arg0, %c0_i32, %c0_i32_0, %c0_i32_1 : i32, i32, i32, i32
  }
  func.func @transform_3(%arg0: i32) -> (i32, i32, i32) {
    %c0_i32 = arith.constant 0 : i32
    %c0_i32_0 = arith.constant 0 : i32
    %c0_i32_1 = arith.constant 0 : i32
    %c0_i32_2 = arith.constant 0 : i32
    return %c0_i32, %c0_i32_0, %c0_i32_1 : i32, i32, i32
  }
  func.func @transform_4(%arg0: i32) -> (i32, i32, i32) {
    %c0_i32 = arith.constant 0 : i32
    %c0_i32_0 = arith.constant 0 : i32
    %c0_i32_1 = arith.constant 0 : i32
    %c0_i32_2 = arith.constant 0 : i32
    return %c0_i32, %c0_i32_0, %c0_i32_1 : i32, i32, i32
  }
  func.func @transform_5(%arg0: i32) -> (i32, i32, i32, i32) {
    %c0_i32 = arith.constant 0 : i32
    %c0_i32_0 = arith.constant 0 : i32
    %c0_i32_1 = arith.constant 0 : i32
    %c0_i32_2 = arith.constant 0 : i32
    return %arg0, %c0_i32, %c0_i32_0, %c0_i32_1 : i32, i32, i32, i32
  }
}

</mosaic_0001>

<llo_original>
// kernel: tpu_custom_call.1
$region0: #{tpu_custom_call.1}
  #allocation0 [shape = 'u32[]', space=smem, size = 0x4, offset = 0x4, fixed_abs, tag = 'smem constant byte address 0x4 - core index']
  #allocation1 [shape = 'u32[144,128]{1,0:T(1,128)}', space=vmem, size = 0x12000, scoped, tag = 'internal scratch']
  %s0 = inlined_call_operand.hbm [shape: f32[2,2,16,16], index: 0, kind: input, shape index: {}]
  %s1 = inlined_call_operand.hbm [shape: f32[2,2,16,16], index: 1, kind: input, shape index: {}]
  %s2 = inlined_call_operand.hbm [shape: f32[2,2,16,16], index: 2, kind: input, shape index: {}]
  %s3 = inlined_call_operand.hbm [shape: f32[4,16,16], index: 3, kind: input, shape index: {}]
  %s4 = inlined_call_operand.hbm [shape: f32[4,16,16], index: 4, kind: input, shape index: {}]
  %s5 = inlined_call_operand.hbm [shape: f32[2,2,16,16], index: 5, kind: output, shape index: {}]
  %s6 = sld [smem:[#allocation0]]
  $region73: #{tpu_custom_call.1} parent=0
    _
  %s8 = ssub.s32 1, %s6
  %s9 = scalar_select 0, %s8, %s6
  $region1: #{tpu_custom_call.1} parent=0
    #allocation2 [shape = 'u8[32768]{0}', space=vmem, size = 0x8000, scoped, tag = 'input window, operand 0']
    #allocation3 [shape = 's32[2]{0}', space=sflag, size = 0x8, scoped, tag = 'scoped memory for tpu_custom_call.1']
    #allocation4 [shape = 's32[2]{0}', space=sflag, size = 0x8, scoped, tag = 'scoped memory for tpu_custom_call.1']
    #allocation5 [shape = 'u8[32768]{0}', space=vmem, size = 0x8000, scoped, tag = 'input window, operand 1']
    #allocation6 [shape = 's32[2]{0}', space=sflag, size = 0x8, scoped, tag = 'scoped memory for tpu_custom_call.1']
    #allocation7 [shape = 'u8[16384]{0}', space=vmem, size = 0x4000, scoped, tag = 'input window, operand 2']
    #allocation8 [shape = 'u8[32768]{0}', space=vmem, size = 0x8000, scoped, tag = 'input window, operand 3, single buffered']
    #allocation9 [shape = 's32[1]{0}', space=sflag, size = 0x4, scoped, tag = 'scoped memory for tpu_custom_call.1']
    #allocation10 [shape = 'u8[32768]{0}', space=vmem, size = 0x8000, scoped, tag = 'input window, operand 4, single buffered']
    #allocation11 [shape = 'u8[32768]{0}', space=vmem, size = 0x8000, scoped, tag = 'output window, operand 0']
    %10 = vsyncpa [#allocation3], 0
    %s11 = scalar_lea.sflag [#allocation3], 1
    %12 = vsyncpa %s11, 0
    %13 = vsyncpa [#allocation6], 0
    %s14 = scalar_lea.sflag [#allocation6], 1
    %15 = vsyncpa %s14, 0
    %16 = vsyncpa [#allocation9], 0
    %17 = vsyncpa [#allocation4], 0
    %s18 = scalar_lea.sflag [#allocation4], 1
    %19 = vsyncpa %s18, 0
    loop: start=0, step=1, limit=4
    $region2: #{tpu_custom_call.1} parent=1 // loop_pre_header
      _
    $region3: #{tpu_custom_call.1} parent=1 // loop_header
      %s21 = sphi 0, %s25
      %p22 = scmp.ge.s32.totalorder %s21, 4
      %s31 = sphi 0, %s33
      %s34 = sphi 0, %s31
      %s35 = sphi 0, %s34
      %s51 = sphi 0, %s35
      %s57 = sphi 0, %s59
      %s60 = sphi 0, %s57
      %s61 = sphi 0, %s60
      %s77 = sphi 0, %s61
      %s83 = sphi 0, %s85
      %s86 = sphi 0, %s83
      %s87 = sphi 0, %s86
      %s103 = sphi 0, %s87
      %s107 = sphi 0, %s107
      %s109 = sphi 0, %s107
      %s110 = sphi 0, %s109
      %s124 = sphi 0, %s110
      %s128 = sphi 0, %s128
      %s130 = sphi 0, %s128
      %s131 = sphi 0, %s130
      %s145 = sphi 0, %s131
      %s151 = sphi 0, %s153
      %s154 = sphi 0, %s151
      %s155 = sphi 0, %s154
      %s171 = sphi 0, %s155
    $region4: #{tpu_custom_call.1} parent=1 // loop_header_branch
      %24 = sbr.rel (%p22) target = $region8
    $region5: #{tpu_custom_call.1} parent=1 // loop_body
      %s26 = ssub.s32 %s21, 1
      %s27 = ssub.s32 %s21, 2
      %s28 = sadd.s32 %s21, 1
      %s29 = ssub.s32 %s21, %s28
      %p30 = scmp.eq.s32.totalorder %s29, 0
      %s32 = sadd.s32 %s31, 1
      %s33 = scalar_select %p30, %s31, %s32
      %p36 = pneg %p30
      %p37 = scmp.eq.s32.totalorder %s21, 1
      %p38 = por %p36, %p37
      %p39 = scmp.ne.s32.totalorder %s31, %s34
      %p40 = scmp.eq.s32.totalorder %s21, 0
      %p41 = por %p39, %p40
      %p42 = scmp.ne.s32.totalorder %s31, %s34
      %p43 = scmp.eq.s32.totalorder %s26, 1
      %p44 = por %p42, %p43
      %p45 = scmp.ne.s32.totalorder %s34, %s35
      %p46 = scmp.eq.s32.totalorder %s26, 0
      %p47 = por %p45, %p46
      %p48 = scmp.ne.s32.totalorder %s34, %s35
      %p49 = scmp.eq.s32.totalorder %s27, 1
      %p50 = por %p48, %p49
      %p52 = scmp.ne.s32.totalorder %s35, %s51
      %p53 = scmp.eq.s32.totalorder %s27, 0
      %p54 = por %p52, %p53
      %s55 = ssub.s32 %s21, %s28
      %p56 = scmp.eq.s32.totalorder %s55, 0
      %s58 = sadd.s32 %s57, 1
      %s59 = scalar_select %p56, %s57, %s58
      %p62 = pneg %p56
      %p63 = scmp.eq.s32.totalorder %s21, 1
      %p64 = por %p62, %p63
      %p65 = scmp.ne.s32.totalorder %s57, %s60
      %p66 = scmp.eq.s32.totalorder %s21, 0
      %p67 = por %p65, %p66
      %p68 = scmp.ne.s32.totalorder %s57, %s60
      %p69 = scmp.eq.s32.totalorder %s26, 1
      %p70 = por %p68, %p69
      %p71 = scmp.ne.s32.totalorder %s60, %s61
      %p72 = scmp.eq.s32.totalorder %s26, 0
      %p73 = por %p71, %p72
      %p74 = scmp.ne.s32.totalorder %s60, %s61
      %p75 = scmp.eq.s32.totalorder %s27, 1
      %p76 = por %p74, %p75
      %p78 = scmp.ne.s32.totalorder %s61, %s77
      %p79 = scmp.eq.s32.totalorder %s27, 0
      %p80 = por %p78, %p79
      %s81 = ssub.s32 %s21, %s28
      %p82 = scmp.eq.s32.totalorder %s81, 0
      %s84 = sadd.s32 %s83, 1
      %s85 = scalar_select %p82, %s83, %s84
      %p88 = pneg %p82
      %p89 = scmp.eq.s32.totalorder %s21, 1
      %p90 = por %p88, %p89
      %p91 = scmp.ne.s32.totalorder %s83, %s86
      %p92 = scmp.eq.s32.totalorder %s21, 0
      %p93 = por %p91, %p92
      %p94 = scmp.ne.s32.totalorder %s83, %s86
      %p95 = scmp.eq.s32.totalorder %s26, 1
      %p96 = por %p94, %p95
      %p97 = scmp.ne.s32.totalorder %s86, %s87
      %p98 = scmp.eq.s32.totalorder %s26, 0
      %p99 = por %p97, %p98
      %p100 = scmp.ne.s32.totalorder %s86, %s87
      %p101 = scmp.eq.s32.totalorder %s27, 1
      %p102 = por %p100, %p101
      %p104 = scmp.ne.s32.totalorder %s87, %s103
      %p105 = scmp.eq.s32.totalorder %s27, 0
      %p106 = por %p104, %p105
      %s108 = sadd.s32 %s107, 1
      %p111 = scmp.eq.s32.totalorder %s21, 1
      %p112 = scmp.ne.s32.totalorder %s107, %s109
      %p113 = scmp.eq.s32.totalorder %s21, 0
      %p114 = por %p112, %p113
      %p115 = scmp.ne.s32.totalorder %s107, %s109
      %p116 = scmp.eq.s32.totalorder %s26, 1
      %p117 = por %p115, %p116
      %p118 = scmp.ne.s32.totalorder %s109, %s110
      %p119 = scmp.eq.s32.totalorder %s26, 0
      %p120 = por %p118, %p119
      %p121 = scmp.ne.s32.totalorder %s109, %s110
      %p122 = scmp.eq.s32.totalorder %s27, 1
      %p123 = por %p121, %p122
      %p125 = scmp.ne.s32.totalorder %s110, %s124
      %p126 = scmp.eq.s32.totalorder %s27, 0
      %p127 = por %p125, %p126
      %s129 = sadd.s32 %s128, 1
      %p132 = scmp.eq.s32.totalorder %s21, 1
      %p133 = scmp.ne.s32.totalorder %s128, %s130
      %p134 = scmp.eq.s32.totalorder %s21, 0
      %p135 = por %p133, %p134
      %p136 = scmp.ne.s32.totalorder %s128, %s130
      %p137 = scmp.eq.s32.totalorder %s26, 1
      %p138 = por %p136, %p137
      %p139 = scmp.ne.s32.totalorder %s130, %s131
      %p140 = scmp.eq.s32.totalorder %s26, 0
      %p141 = por %p139, %p140
      %p142 = scmp.ne.s32.totalorder %s130, %s131
      %p143 = scmp.eq.s32.totalorder %s27, 1
      %p144 = por %p142, %p143
      %p146 = scmp.ne.s32.totalorder %s131, %s145
      %p147 = scmp.eq.s32.totalorder %s27, 0
      %p148 = por %p146, %p147
      %s149 = ssub.s32 %s21, %s28
      %p150 = scmp.eq.s32.totalorder %s149, 0
      %s152 = sadd.s32 %s151, 1
      %s153 = scalar_select %p150, %s151, %s152
      %p156 = pneg %p150
      %p157 = scmp.eq.s32.totalorder %s21, 1
      %p158 = por %p156, %p157
      %p159 = scmp.ne.s32.totalorder %s151, %s154
      %p160 = scmp.eq.s32.totalorder %s21, 0
      %p161 = por %p159, %p160
      %p162 = scmp.ne.s32.totalorder %s151, %s154
      %p163 = scmp.eq.s32.totalorder %s26, 1
      %p164 = por %p162, %p163
      %p165 = scmp.ne.s32.totalorder %s154, %s155
      %p166 = scmp.eq.s32.totalorder %s26, 0
      %p167 = por %p165, %p166
      %p168 = scmp.ne.s32.totalorder %s154, %s155
      %p169 = scmp.eq.s32.totalorder %s27, 1
      %p170 = por %p168, %p169
      %p172 = scmp.ne.s32.totalorder %s155, %s171
      %p173 = scmp.eq.s32.totalorder %s27, 0
      %p174 = por %p172, %p173
      %p175 = scmp.le.s32.totalorder 1, %s21
      %p176 = scmp.lt.s32.totalorder %s21, 3
      %p177 = pnand %p175, %p176
      %p178 = pneg %p177
      // Predicated region
      $region9: #{tpu_custom_call.1} parent=5 // pred_check
        _
      $region10: #{tpu_custom_call.1} parent=5 // pred_check_branch
        %180 = sbr.rel (%p177) target = $region12
      $region11: #{tpu_custom_call.1} parent=5 // pred_region
        %s181 = ssub.s32 %s21, 1
        // Predicated region
        $region13: #{tpu_custom_call.1} parent=11 // pred_check
          %p182 = pneg %p120
        $region14: #{tpu_custom_call.1} parent=11 // pred_check_branch
          %184 = sbr.rel (%p182) target = $region16
        $region15: #{tpu_custom_call.1} parent=11 // pred_region
          %s186 = ssub.s32 1024, 1024
          %187 = vsyncadd [#allocation9], %s186
          %s188 = sshll.u32 [#allocation8], 4
          %s189 = int_to_ptr.vmem [resolvable:$true] %s188
          %194 = dma.hbm_to_vmem [thread:$0]  %s3, 1024, %s189, [#allocation9], 128, 128, 8
        $region16: #{tpu_custom_call.1} parent=11 // pred_fallthru
          _
        // Predicated region
        $region17: #{tpu_custom_call.1} parent=11 // pred_check
          %p195 = pneg %p141
        $region18: #{tpu_custom_call.1} parent=11 // pred_check_branch
          %197 = sbr.rel (%p195) target = $region20
        $region19: #{tpu_custom_call.1} parent=11 // pred_region
          %s199 = ssub.s32 1024, 1024
          %200 = vsyncadd [#allocation9], %s199
          %s201 = sshll.u32 [#allocation10], 4
          %s202 = int_to_ptr.vmem [resolvable:$true] %s201
          %207 = dma.hbm_to_vmem [thread:$0]  %s4, 1024, %s202, [#allocation9], 128, 128, 8
        $region20: #{tpu_custom_call.1} parent=11 // pred_fallthru
          _
      $region12: #{tpu_custom_call.1} parent=5 // pred_fallthru
        _
      %p208 = scmp.lt.s32.totalorder %s21, 2
      // Predicated region
      $region21: #{tpu_custom_call.1} parent=5 // pred_check
        %p209 = pneg %p208
      $region22: #{tpu_custom_call.1} parent=5 // pred_check_branch
        %211 = sbr.rel (%p209) target = $region24
      $region23: #{tpu_custom_call.1} parent=5 // pred_region
        // Predicated region
        $region25: #{tpu_custom_call.1} parent=23 // pred_check
          %p212 = pneg %p41
        $region26: #{tpu_custom_call.1} parent=23 // pred_check_branch
          %214 = sbr.rel (%p212) target = $region28
        $region27: #{tpu_custom_call.1} parent=23 // pred_region
          %s215 = sand.u32 %s31, 1
          %s216 = scalar_lea.sflag [#allocation3], %s215
          %s217 = sand.u32 %s31, 1
          %s218 = smul.addr %s217, 32
          %s219 = scalar_lea.vmem [#allocation2], %s218
          %s221 = ssub.s32 512, 512
          %222 = vsyncadd %s216, %s221
          %s223 = smul.addr %s21, 4
          %s224 = smul.addr %s223, 128
          %s225 = scalar_lea.hbm %s0, %s224
          %s226 = sshll.u32 %s219, 4
          %s227 = int_to_ptr.vmem [resolvable:$true] %s226
          %232 = dma.hbm_to_vmem [thread:$0]  %s225, 512, %s227, %s216, 128, 128, 8
        $region28: #{tpu_custom_call.1} parent=23 // pred_fallthru
          _
        // Predicated region
        $region29: #{tpu_custom_call.1} parent=23 // pred_check
          %p233 = pneg %p67
        $region30: #{tpu_custom_call.1} parent=23 // pred_check_branch
          %235 = sbr.rel (%p233) target = $region32
        $region31: #{tpu_custom_call.1} parent=23 // pred_region
          %s236 = sand.u32 %s21, 1
          %s237 = scalar_lea.sflag [#allocation6], %s236
          %s238 = sand.u32 %s57, 1
          %s239 = smul.addr %s238, 32
          %s240 = scalar_lea.vmem [#allocation5], %s239
          %s242 = ssub.s32 512, 512
          %243 = vsyncadd %s237, %s242
          %s244 = smul.addr %s21, 4
          %s245 = smul.addr %s244, 128
          %s246 = scalar_lea.hbm %s1, %s245
          %s247 = sshll.u32 %s240, 4
          %s248 = int_to_ptr.vmem [resolvable:$true] %s247
          %253 = dma.hbm_to_vmem [thread:$0]  %s246, 512, %s248, %s237, 128, 128, 8
        $region32: #{tpu_custom_call.1} parent=23 // pred_fallthru
          _
        // Predicated region
        $region33: #{tpu_custom_call.1} parent=23 // pred_check
          %p254 = pneg %p93
        $region34: #{tpu_custom_call.1} parent=23 // pred_check_branch
          %256 = sbr.rel (%p254) target = $region36
        $region35: #{tpu_custom_call.1} parent=23 // pred_region
          %s257 = sand.u32 %s21, 1
          %s258 = scalar_lea.sflag [#allocation6], %s257
          %s259 = sand.u32 %s83, 1
          %s260 = smul.addr %s259, 16
          %s261 = scalar_lea.vmem [#allocation7], %s260
          %s263 = ssub.s32 256, 256
          %264 = vsyncadd %s258, %s263
          %s265 = smul.addr %s21, 4
          %s266 = smul.addr %s265, 128
          %s267 = scalar_lea.hbm %s2, %s266
          %s268 = sshll.u32 %s261, 4
          %s269 = int_to_ptr.vmem [resolvable:$true] %s268
          %274 = dma.hbm_to_vmem [thread:$0]  %s267, 256, %s269, %s258, 128, 128, 8
        $region36: #{tpu_custom_call.1} parent=23 // pred_fallthru
          _
      $region24: #{tpu_custom_call.1} parent=5 // pred_fallthru
        _
      %p275 = scmp.le.s32.totalorder 1, %s21
      %p276 = scmp.lt.s32.totalorder %s21, 3
      %p277 = pnand %p275, %p276
      %p278 = pneg %p277
      // Predicated region
      $region37: #{tpu_custom_call.1} parent=5 // pred_check
        _
      $region38: #{tpu_custom_call.1} parent=5 // pred_check_branch
        %280 = sbr.rel (%p277) target = $region40
      $region39: #{tpu_custom_call.1} parent=5 // pred_region
        %s281 = ssub.s32 %s21, 1
        %s282 = sand.u32 %s34, 1
        %s283 = scalar_lea.sflag [#allocation3], %s282
        %s284 = sand.u32 %s34, 1
        %s285 = smul.addr %s284, 32
        %s286 = scalar_lea.vmem [#allocation2], %s285
        // Predicated region
        $region41: #{tpu_custom_call.1} parent=39 // pred_check
          %p287 = pneg %p47
        $region42: #{tpu_custom_call.1} parent=39 // pred_check_branch
          %289 = sbr.rel (%p287) target = $region44
        $region43: #{tpu_custom_call.1} parent=39 // pred_region
          %290 = dma.done %s283, 512
        $region44: #{tpu_custom_call.1} parent=39 // pred_fallthru
          _
        %s291 = sand.u32 %s26, 1
        %s292 = scalar_lea.sflag [#allocation6], %s291
        %s293 = sand.u32 %s60, 1
        %s294 = smul.addr %s293, 32
        %s295 = scalar_lea.vmem [#allocation5], %s294
        // Predicated region
        $region45: #{tpu_custom_call.1} parent=39 // pred_check
          %p296 = pneg %p73
        $region46: #{tpu_custom_call.1} parent=39 // pred_check_branch
          %298 = sbr.rel (%p296) target = $region48
        $region47: #{tpu_custom_call.1} parent=39 // pred_region
          %299 = dma.done %s292, 512
        $region48: #{tpu_custom_call.1} parent=39 // pred_fallthru
          _
        %s300 = sand.u32 %s26, 1
        %s301 = scalar_lea.sflag [#allocation6], %s300
        %s302 = sand.u32 %s86, 1
        %s303 = smul.addr %s302, 16
        %s304 = scalar_lea.vmem [#allocation7], %s303
        // Predicated region
        $region49: #{tpu_custom_call.1} parent=39 // pred_check
          %p305 = pneg %p99
        $region50: #{tpu_custom_call.1} parent=39 // pred_check_branch
          %307 = sbr.rel (%p305) target = $region52
        $region51: #{tpu_custom_call.1} parent=39 // pred_region
          %308 = dma.done %s301, 256
        $region52: #{tpu_custom_call.1} parent=39 // pred_fallthru
          _
        // Predicated region
        $region53: #{tpu_custom_call.1} parent=39 // pred_check
          %p309 = pneg %p120
        $region54: #{tpu_custom_call.1} parent=39 // pred_check_branch
          %311 = sbr.rel (%p309) target = $region56
        $region55: #{tpu_custom_call.1} parent=39 // pred_region
          %312 = dma.done [#allocation9], 1024
        $region56: #{tpu_custom_call.1} parent=39 // pred_fallthru
          _
        // Predicated region
        $region57: #{tpu_custom_call.1} parent=39 // pred_check
          %p313 = pneg %p141
        $region58: #{tpu_custom_call.1} parent=39 // pred_check_branch
          %315 = sbr.rel (%p313) target = $region60
        $region59: #{tpu_custom_call.1} parent=39 // pred_region
          %316 = dma.done [#allocation9], 1024
        $region60: #{tpu_custom_call.1} parent=39 // pred_fallthru
          _
        %s317 = sand.u32 %s34, 1
        %s318 = scalar_lea.sflag [#allocation3], %s317
        %s319 = sand.u32 %s34, 1
        %s320 = smul.addr %s319, 32
        %s321 = scalar_lea.vmem [#allocation2], %s320
        %p322 = pneg %p47
        %p323 = pneg %p44
        %s324 = sand.u32 %s26, 1
        %s325 = scalar_lea.sflag [#allocation6], %s324
        %s326 = sand.u32 %s60, 1
        %s327 = smul.addr %s326, 32
        %s328 = scalar_lea.vmem [#allocation5], %s327
        %p329 = pneg %p73
        %p330 = pneg %p70
        %s331 = sand.u32 %s26, 1
        %s332 = scalar_lea.sflag [#allocation6], %s331
        %s333 = sand.u32 %s86, 1
        %s334 = smul.addr %s333, 16
        %s335 = scalar_lea.vmem [#allocation7], %s334
        %p336 = pneg %p99
        %p337 = pneg %p96
        %p338 = pneg %p120
        %p339 = pneg %p117
        %p340 = pneg %p141
        %p341 = pneg %p138
        %p342 = pneg %p167
        %p343 = pneg %p164
        %s344 = sand.u32 %s154, 1
        %s345 = scalar_lea.sflag [#allocation4], %s344
        %s346 = sand.u32 %s154, 1
        %s347 = smul.addr %s346, 32
        %s348 = scalar_lea.vmem [#allocation11], %s347
        %v349 = vld [vmem:[#allocation8] sm:$0xff]
        %v350 = vld [vmem:[#allocation8 + $0x8] sm:$0xff]
        %s351 = scalar_lea.vmem [#allocation8], 16
        %v352 = vld [vmem:[%s351] sm:$0xff]
        %v353 = vld [vmem:[%s351 + $0x8] sm:$0xff]
        %s354 = scalar_lea.vmem [#allocation8], 32
        %v355 = vld [vmem:[%s354] sm:$0xff]
        %v356 = vld [vmem:[%s354 + $0x8] sm:$0xff]
        %s357 = scalar_lea.vmem [#allocation8], 48
        %v358 = vld [vmem:[%s357] sm:$0xff]
        %v359 = vld [vmem:[%s357 + $0x8] sm:$0xff]
        %v360 = vld [vmem:[#allocation10] sm:$0xff]
        %v361 = vld [vmem:[#allocation10 + $0x8] sm:$0xff]
        %s362 = scalar_lea.vmem [#allocation10], 16
        %v363 = vld [vmem:[%s362] sm:$0xff]
        %v364 = vld [vmem:[%s362 + $0x8] sm:$0xff]
        %s365 = scalar_lea.vmem [#allocation10], 32
        %v366 = vld [vmem:[%s365] sm:$0xff]
        %v367 = vld [vmem:[%s365 + $0x8] sm:$0xff]
        %s368 = scalar_lea.vmem [#allocation10], 48
        %v369 = vld [vmem:[%s368] sm:$0xff]
        %v370 = vld [vmem:[%s368 + $0x8] sm:$0xff]
        %v371 = vld [vmem:[%s286] sm:$0xff]
        %v372 = vld [vmem:[%s286 + $0x8] sm:$0xff]
        %s373 = scalar_lea.vmem %s286, 16 [#allocation2]
        %v374 = vld [vmem:[%s373] sm:$0xff]
        %v375 = vld [vmem:[%s373 + $0x8] sm:$0xff]
        %vm376 = vcmask 130048
        %v378 = vsel %vm376, %v349, 0
        %v381 = vsel %vm376, %v350, 0
        %383 = vmatprep.subr.mxu0 0.0
        %384 = vmatpush1.msra.mxu0 %v371
        %385 = vmatprep.subr.mxu0 0.0
        %386 = vmatpush1.msra.mxu0 %v372
        %387 = vmatprep.subr.mxu0 0.0
        %388 = vmatpush1.msra.mxu0 0.0
        %389 = vmatprep.subr.mxu0 0.0
        %390 = vmatpush1.msra.mxu0 0.0
        %391 = vmatprep.subr.mxu0 0.0
        %392 = vmatpush1.msra.mxu0 0.0
        %393 = vmatprep.subr.mxu0 0.0
        %394 = vmatpush1.msra.mxu0 0.0
        %395 = vmatprep.subr.mxu0 0.0
        %396 = vmatpush1.msra.mxu0 0.0
        %397 = vmatprep.subr.mxu0 0.0
        %398 = vmatpush1.msra.mxu0 0.0
        %399 = vmatprep.subr.mxu0 0.0
        %400 = vmatpush1.msra.mxu0 0.0
        %401 = vmatprep.subr.mxu0 0.0
        %402 = vmatpush1.msra.mxu0 0.0
        %403 = vmatprep.subr.mxu0 0.0
        %404 = vmatpush1.msra.mxu0 0.0
        %405 = vmatprep.subr.mxu0 0.0
        %406 = vmatpush1.msra.mxu0 0.0
        %407 = vmatprep.subr.mxu0 0.0
        %408 = vmatpush1.msra.mxu0 0.0
        %409 = vmatprep.subr.mxu0 0.0
        %410 = vmatpush1.msra.mxu0 0.0
        %411 = vmatprep.subr.mxu0 0.0
        %412 = vmatpush1.msra.mxu0 0.0
        %413 = vmatprep.subr.mxu0 0.0
        %414 = vmatpush1.msra.mxu0 0.0
        %415 = vmatprep.subr.mxu0 0.0
        %416 = vmatpush1.msra.mxu0 0.0
        %417 = vmatprep.subr.mxu0 0.0
        %418 = vmatpush1.msra.mxu0 0.0
        %419 = vmatprep.subr.mxu0 0.0
        %420 = vmatpush1.msra.mxu0 0.0
        %421 = vmatprep.subr.mxu0 0.0
        %422 = vmatpush1.msra.mxu0 0.0
        %423 = vmatprep.subr.mxu0 0.0
        %424 = vmatpush1.msra.mxu0 0.0
        %425 = vmatprep.subr.mxu0 0.0
        %426 = vmatpush1.msra.mxu0 0.0
        %427 = vmatprep.subr.mxu0 0.0
        %428 = vmatpush1.msra.mxu0 0.0
        %429 = vmatprep.subr.mxu0 0.0
        %430 = vmatpush1.msra.mxu0 0.0
        %431 = vmatprep.subr.mxu0 0.0
        %432 = vmatpush1.msra.mxu0 0.0
        %433 = vmatprep.subr.mxu0 0.0
        %434 = vmatpush1.msra.mxu0 0.0
        %435 = vmatprep.subr.mxu0 0.0
        %436 = vmatpush1.msra.mxu0 0.0
        %437 = vmatprep.subr.mxu0 0.0
        %438 = vmatpush1.msra.mxu0 0.0
        %439 = vmatprep.subr.mxu0 0.0
        %440 = vmatpush1.msra.mxu0 0.0
        %441 = vmatprep.subr.mxu0 0.0
        %442 = vmatpush1.msra.mxu0 0.0
        %443 = vmatprep.subr.mxu0 0.0
        %444 = vmatpush1.msra.mxu0 0.0
        %445 = vmatprep.subr.mxu0 0.0
        %446 = vmatpush1.msra.mxu0 0.0
        %447 = vmatprep.mubr.f32.mxu0 0.0
        %448 = vmatmul.mubr.f32.gmra.mrb[0].mxu0 %v378
        %v449 = vpop.f32.mrb[0].mxu0
        %v450 = vadd.f32 0.0, %v449
        %v451 = vpop.f32.mrb[0].mxu0
        %452 = vmatprep.mubr.f32.mxu0 0.0
        %453 = vmatmul.mubr.f32.gmra.mrb[0].mxu0 %v381
        %v454 = vpop.f32.mrb[0].mxu0
        %v455 = vadd.f32 0.0, %v454
        %v456 = vpop.f32.mrb[0].mxu0
        %457 = vdwg.mxu0
        %v459 = vsel %vm376, %v352, 0
        %v462 = vsel %vm376, %v353, 0
        %464 = vmatprep.subr.mxu0 0.0
        %465 = vmatpush1.msra.mxu0 %v374
        %466 = vmatprep.subr.mxu0 0.0
        %467 = vmatpush1.msra.mxu0 %v375
        %468 = vmatprep.subr.mxu0 0.0
        %469 = vmatpush1.msra.mxu0 0.0
        %470 = vmatprep.subr.mxu0 0.0
        %471 = vmatpush1.msra.mxu0 0.0
        %472 = vmatprep.subr.mxu0 0.0
        %473 = vmatpush1.msra.mxu0 0.0
        %474 = vmatprep.subr.mxu0 0.0
        %475 = vmatpush1.msra.mxu0 0.0
        %476 = vmatprep.subr.mxu0 0.0
        %477 = vmatpush1.msra.mxu0 0.0
        %478 = vmatprep.subr.mxu0 0.0
        %479 = vmatpush1.msra.mxu0 0.0
        %480 = vmatprep.subr.mxu0 0.0
        %481 = vmatpush1.msra.mxu0 0.0
        %482 = vmatprep.subr.mxu0 0.0
        %483 = vmatpush1.msra.mxu0 0.0
        %484 = vmatprep.subr.mxu0 0.0
        %485 = vmatpush1.msra.mxu0 0.0
        %486 = vmatprep.subr.mxu0 0.0
        %487 = vmatpush1.msra.mxu0 0.0
        %488 = vmatprep.subr.mxu0 0.0
        %489 = vmatpush1.msra.mxu0 0.0
        %490 = vmatprep.subr.mxu0 0.0
        %491 = vmatpush1.msra.mxu0 0.0
        %492 = vmatprep.subr.mxu0 0.0
        %493 = vmatpush1.msra.mxu0 0.0
        %494 = vmatprep.subr.mxu0 0.0
        %495 = vmatpush1.msra.mxu0 0.0
        %496 = vmatprep.subr.mxu0 0.0
        %497 = vmatpush1.msra.mxu0 0.0
        %498 = vmatprep.subr.mxu0 0.0
        %499 = vmatpush1.msra.mxu0 0.0
        %500 = vmatprep.subr.mxu0 0.0
        %501 = vmatpush1.msra.mxu0 0.0
        %502 = vmatprep.subr.mxu0 0.0
        %503 = vmatpush1.msra.mxu0 0.0
        %504 = vmatprep.subr.mxu0 0.0
        %505 = vmatpush1.msra.mxu0 0.0
        %506 = vmatprep.subr.mxu0 0.0
        %507 = vmatpush1.msra.mxu0 0.0
        %508 = vmatprep.subr.mxu0 0.0
        %509 = vmatpush1.msra.mxu0 0.0
        %510 = vmatprep.subr.mxu0 0.0
        %511 = vmatpush1.msra.mxu0 0.0
        %512 = vmatprep.subr.mxu0 0.0
        %513 = vmatpush1.msra.mxu0 0.0
        %514 = vmatprep.subr.mxu0 0.0
        %515 = vmatpush1.msra.mxu0 0.0
        %516 = vmatprep.subr.mxu0 0.0
        %517 = vmatpush1.msra.mxu0 0.0
        %518 = vmatprep.subr.mxu0 0.0
        %519 = vmatpush1.msra.mxu0 0.0
        %520 = vmatprep.subr.mxu0 0.0
        %521 = vmatpush1.msra.mxu0 0.0
        %522 = vmatprep.subr.mxu0 0.0
        %523 = vmatpush1.msra.mxu0 0.0
        %524 = vmatprep.subr.mxu0 0.0
        %525 = vmatpush1.msra.mxu0 0.0
        %526 = vmatprep.subr.mxu0 0.0
        %527 = vmatpush1.msra.mxu0 0.0
        %528 = vmatprep.mubr.f32.mxu0 0.0
        %529 = vmatmul.mubr.f32.gmra.mrb[0].mxu0 %v459
        %v530 = vpop.f32.mrb[0].mxu0
        %v531 = vadd.f32 0.0, %v530
        %v532 = vpop.f32.mrb[0].mxu0
        %533 = vmatprep.mubr.f32.mxu0 0.0
        %534 = vmatmul.mubr.f32.gmra.mrb[0].mxu0 %v462
        %v535 = vpop.f32.mrb[0].mxu0
        %v536 = vadd.f32 0.0, %v535
        %v537 = vpop.f32.mrb[0].mxu0
        %538 = vdwg.mxu0
        %v539 = vadd.f32 %v371, %v374
        %v540 = vadd.f32 %v372, %v375
        %v542 = vsel %vm376, %v355, 0
        %v545 = vsel %vm376, %v356, 0
        %547 = vmatprep.subr.mxu0 0.0
        %548 = vmatpush1.msra.mxu0 %v539
        %549 = vmatprep.subr.mxu0 0.0
        %550 = vmatpush1.msra.mxu0 %v540
        %551 = vmatprep.subr.mxu0 0.0
        %552 = vmatpush1.msra.mxu0 0.0
        %553 = vmatprep.subr.mxu0 0.0
        %554 = vmatpush1.msra.mxu0 0.0
        %555 = vmatprep.subr.mxu0 0.0
        %556 = vmatpush1.msra.mxu0 0.0
        %557 = vmatprep.subr.mxu0 0.0
        %558 = vmatpush1.msra.mxu0 0.0
        %559 = vmatprep.subr.mxu0 0.0
        %560 = vmatpush1.msra.mxu0 0.0
        %561 = vmatprep.subr.mxu0 0.0
        %562 = vmatpush1.msra.mxu0 0.0
        %563 = vmatprep.subr.mxu0 0.0
        %564 = vmatpush1.msra.mxu0 0.0
        %565 = vmatprep.subr.mxu0 0.0
        %566 = vmatpush1.msra.mxu0 0.0
        %567 = vmatprep.subr.mxu0 0.0
        %568 = vmatpush1.msra.mxu0 0.0
        %569 = vmatprep.subr.mxu0 0.0
        %570 = vmatpush1.msra.mxu0 0.0
        %571 = vmatprep.subr.mxu0 0.0
        %572 = vmatpush1.msra.mxu0 0.0
        %573 = vmatprep.subr.mxu0 0.0
        %574 = vmatpush1.msra.mxu0 0.0
        %575 = vmatprep.subr.mxu0 0.0
        %576 = vmatpush1.msra.mxu0 0.0
        %577 = vmatprep.subr.mxu0 0.0
        %578 = vmatpush1.msra.mxu0 0.0
        %579 = vmatprep.subr.mxu0 0.0
        %580 = vmatpush1.msra.mxu0 0.0
        %581 = vmatprep.subr.mxu0 0.0
        %582 = vmatpush1.msra.mxu0 0.0
        %583 = vmatprep.subr.mxu0 0.0
        %584 = vmatpush1.msra.mxu0 0.0
        %585 = vmatprep.subr.mxu0 0.0
        %586 = vmatpush1.msra.mxu0 0.0
        %587 = vmatprep.subr.mxu0 0.0
        %588 = vmatpush1.msra.mxu0 0.0
        %589 = vmatprep.subr.mxu0 0.0
        %590 = vmatpush1.msra.mxu0 0.0
        %591 = vmatprep.subr.mxu0 0.0
        %592 = vmatpush1.msra.mxu0 0.0
        %593 = vmatprep.subr.mxu0 0.0
        %594 = vmatpush1.msra.mxu0 0.0
        %595 = vmatprep.subr.mxu0 0.0
        %596 = vmatpush1.msra.mxu0 0.0
        %597 = vmatprep.subr.mxu0 0.0
        %598 = vmatpush1.msra.mxu0 0.0
        %599 = vmatprep.subr.mxu0 0.0
        %600 = vmatpush1.msra.mxu0 0.0
        %601 = vmatprep.subr.mxu0 0.0
        %602 = vmatpush1.msra.mxu0 0.0
        %603 = vmatprep.subr.mxu0 0.0
        %604 = vmatpush1.msra.mxu0 0.0
        %605 = vmatprep.subr.mxu0 0.0
        %606 = vmatpush1.msra.mxu0 0.0
        %607 = vmatprep.subr.mxu0 0.0
        %608 = vmatpush1.msra.mxu0 0.0
        %609 = vmatprep.subr.mxu0 0.0
        %610 = vmatpush1.msra.mxu0 0.0
        %611 = vmatprep.mubr.f32.mxu0 0.0
        %612 = vmatmul.mubr.f32.gmra.mrb[0].mxu0 %v542
        %v613 = vpop.f32.mrb[0].mxu0
        %v614 = vadd.f32 0.0, %v613
        %v615 = vpop.f32.mrb[0].mxu0
        %616 = vmatprep.mubr.f32.mxu0 0.0
        %617 = vmatmul.mubr.f32.gmra.mrb[0].mxu0 %v545
        %v618 = vpop.f32.mrb[0].mxu0
        %v619 = vadd.f32 0.0, %v618
        %v620 = vpop.f32.mrb[0].mxu0
        %621 = vdwg.mxu0
        %v622 = vsub.f32 %v450, %v531
        %v623 = vsub.f32 %v455, %v536
        %v624 = vsub.f32 %v614, %v450
        %v625 = vsub.f32 %v619, %v455
        %v626 = vsub.f32 %v624, %v531
        %v627 = vsub.f32 %v625, %v536
        %v629 = vsel %vm376, %v622, 0
        %v632 = vsel %vm376, %v623, 0
        %634 = vmatprep.subr.mxu0 0.0
        %635 = vmatpush1.msra.mxu0 %v360
        %636 = vmatprep.subr.mxu0 0.0
        %637 = vmatpush1.msra.mxu0 %v361
        %638 = vmatprep.subr.mxu0 0.0
        %639 = vmatpush1.msra.mxu0 0.0
        %640 = vmatprep.subr.mxu0 0.0
        %641 = vmatpush1.msra.mxu0 0.0
        %642 = vmatprep.subr.mxu0 0.0
        %643 = vmatpush1.msra.mxu0 0.0
        %644 = vmatprep.subr.mxu0 0.0
        %645 = vmatpush1.msra.mxu0 0.0
        %646 = vmatprep.subr.mxu0 0.0
        %647 = vmatpush1.msra.mxu0 0.0
        %648 = vmatprep.subr.mxu0 0.0
        %649 = vmatpush1.msra.mxu0 0.0
        %650 = vmatprep.subr.mxu0 0.0
        %651 = vmatpush1.msra.mxu0 0.0
        %652 = vmatprep.subr.mxu0 0.0
        %653 = vmatpush1.msra.mxu0 0.0
        %654 = vmatprep.subr.mxu0 0.0
        %655 = vmatpush1.msra.mxu0 0.0
        %656 = vmatprep.subr.mxu0 0.0
        %657 = vmatpush1.msra.mxu0 0.0
        %658 = vmatprep.subr.mxu0 0.0
        %659 = vmatpush1.msra.mxu0 0.0
        %660 = vmatprep.subr.mxu0 0.0
        %661 = vmatpush1.msra.mxu0 0.0
        %662 = vmatprep.subr.mxu0 0.0
        %663 = vmatpush1.msra.mxu0 0.0
        %664 = vmatprep.subr.mxu0 0.0
        %665 = vmatpush1.msra.mxu0 0.0
        %666 = vmatprep.subr.mxu0 0.0
        %667 = vmatpush1.msra.mxu0 0.0
        %668 = vmatprep.subr.mxu0 0.0
        %669 = vmatpush1.msra.mxu0 0.0
        %670 = vmatprep.subr.mxu0 0.0
        %671 = vmatpush1.msra.mxu0 0.0
        %672 = vmatprep.subr.mxu0 0.0
        %673 = vmatpush1.msra.mxu0 0.0
        %674 = vmatprep.subr.mxu0 0.0
        %675 = vmatpush1.msra.mxu0 0.0
        %676 = vmatprep.subr.mxu0 0.0
        %677 = vmatpush1.msra.mxu0 0.0
        %678 = vmatprep.subr.mxu0 0.0
        %679 = vmatpush1.msra.mxu0 0.0
        %680 = vmatprep.subr.mxu0 0.0
        %681 = vmatpush1.msra.mxu0 0.0
        %682 = vmatprep.subr.mxu0 0.0
        %683 = vmatpush1.msra.mxu0 0.0
        %684 = vmatprep.subr.mxu0 0.0
        %685 = vmatpush1.msra.mxu0 0.0
        %686 = vmatprep.subr.mxu0 0.0
        %687 = vmatpush1.msra.mxu0 0.0
        %688 = vmatprep.subr.mxu0 0.0
        %689 = vmatpush1.msra.mxu0 0.0
        %690 = vmatprep.subr.mxu0 0.0
        %691 = vmatpush1.msra.mxu0 0.0
        %692 = vmatprep.subr.mxu0 0.0
        %693 = vmatpush1.msra.mxu0 0.0
        %694 = vmatprep.subr.mxu0 0.0
        %695 = vmatpush1.msra.mxu0 0.0
        %696 = vmatprep.subr.mxu0 0.0
        %697 = vmatpush1.msra.mxu0 0.0
        %698 = vmatprep.mubr.f32.mxu0 0.0
        %699 = vmatmul.mubr.f32.gmra.mrb[0].mxu0 %v629
        %v700 = vpop.f32.mrb[0].mxu0
        %v701 = vadd.f32 0.0, %v700
        %v702 = vpop.f32.mrb[0].mxu0
        %703 = vmatprep.mubr.f32.mxu0 0.0
        %704 = vmatmul.mubr.f32.gmra.mrb[0].mxu0 %v632
        %v705 = vpop.f32.mrb[0].mxu0
        %v706 = vadd.f32 0.0, %v705
        %v707 = vpop.f32.mrb[0].mxu0
        %708 = vdwg.mxu0
        %v710 = vsel %vm376, %v626, 0
        %v713 = vsel %vm376, %v627, 0
        %715 = vmatprep.subr.mxu0 0.0
        %716 = vmatpush1.msra.mxu0 %v363
        %717 = vmatprep.subr.mxu0 0.0
        %718 = vmatpush1.msra.mxu0 %v364
        %719 = vmatprep.subr.mxu0 0.0
        %720 = vmatpush1.msra.mxu0 0.0
        %721 = vmatprep.subr.mxu0 0.0
        %722 = vmatpush1.msra.mxu0 0.0
        %723 = vmatprep.subr.mxu0 0.0
        %724 = vmatpush1.msra.mxu0 0.0
        %725 = vmatprep.subr.mxu0 0.0
        %726 = vmatpush1.msra.mxu0 0.0
        %727 = vmatprep.subr.mxu0 0.0
        %728 = vmatpush1.msra.mxu0 0.0
        %729 = vmatprep.subr.mxu0 0.0
        %730 = vmatpush1.msra.mxu0 0.0
        %731 = vmatprep.subr.mxu0 0.0
        %732 = vmatpush1.msra.mxu0 0.0
        %733 = vmatprep.subr.mxu0 0.0
        %734 = vmatpush1.msra.mxu0 0.0
        %735 = vmatprep.subr.mxu0 0.0
        %736 = vmatpush1.msra.mxu0 0.0
        %737 = vmatprep.subr.mxu0 0.0
        %738 = vmatpush1.msra.mxu0 0.0
        %739 = vmatprep.subr.mxu0 0.0
        %740 = vmatpush1.msra.mxu0 0.0
        %741 = vmatprep.subr.mxu0 0.0
        %742 = vmatpush1.msra.mxu0 0.0
        %743 = vmatprep.subr.mxu0 0.0
        %744 = vmatpush1.msra.mxu0 0.0
        %745 = vmatprep.subr.mxu0 0.0
        %746 = vmatpush1.msra.mxu0 0.0
        %747 = vmatprep.subr.mxu0 0.0
        %748 = vmatpush1.msra.mxu0 0.0
        %749 = vmatprep.subr.mxu0 0.0
        %750 = vmatpush1.msra.mxu0 0.0
        %751 = vmatprep.subr.mxu0 0.0
        %752 = vmatpush1.msra.mxu0 0.0
        %753 = vmatprep.subr.mxu0 0.0
        %754 = vmatpush1.msra.mxu0 0.0
        %755 = vmatprep.subr.mxu0 0.0
        %756 = vmatpush1.msra.mxu0 0.0
        %757 = vmatprep.subr.mxu0 0.0
        %758 = vmatpush1.msra.mxu0 0.0
        %759 = vmatprep.subr.mxu0 0.0
        %760 = vmatpush1.msra.mxu0 0.0
        %761 = vmatprep.subr.mxu0 0.0
        %762 = vmatpush1.msra.mxu0 0.0
        %763 = vmatprep.subr.mxu0 0.0
        %764 = vmatpush1.msra.mxu0 0.0
        %765 = vmatprep.subr.mxu0 0.0
        %766 = vmatpush1.msra.mxu0 0.0
        %767 = vmatprep.subr.mxu0 0.0
        %768 = vmatpush1.msra.mxu0 0.0
        %769 = vmatprep.subr.mxu0 0.0
        %770 = vmatpush1.msra.mxu0 0.0
        %771 = vmatprep.subr.mxu0 0.0
        %772 = vmatpush1.msra.mxu0 0.0
        %773 = vmatprep.subr.mxu0 0.0
        %774 = vmatpush1.msra.mxu0 0.0
        %775 = vmatprep.subr.mxu0 0.0
        %776 = vmatpush1.msra.mxu0 0.0
        %777 = vmatprep.subr.mxu0 0.0
        %778 = vmatpush1.msra.mxu0 0.0
        %779 = vmatprep.mubr.f32.mxu0 0.0
        %780 = vmatmul.mubr.f32.gmra.mrb[0].mxu0 %v710
        %v781 = vpop.f32.mrb[0].mxu0
        %v782 = vadd.f32 0.0, %v781
        %v783 = vpop.f32.mrb[0].mxu0
        %784 = vmatprep.mubr.f32.mxu0 0.0
        %785 = vmatmul.mubr.f32.gmra.mrb[0].mxu0 %v713
        %v786 = vpop.f32.mrb[0].mxu0
        %v787 = vadd.f32 0.0, %v786
        %v788 = vpop.f32.mrb[0].mxu0
        %789 = vdwg.mxu0
        %v790 = vadd.f32 %v622, %v626
        %v791 = vadd.f32 %v623, %v627
        %v793 = vsel %vm376, %v790, 0
        %v796 = vsel %vm376, %v791, 0
        %798 = vmatprep.subr.mxu0 0.0
        %799 = vmatpush1.msra.mxu0 %v366
        %800 = vmatprep.subr.mxu0 0.0
        %801 = vmatpush1.msra.mxu0 %v367
        %802 = vmatprep.subr.mxu0 0.0
        %803 = vmatpush1.msra.mxu0 0.0
        %804 = vmatprep.subr.mxu0 0.0
        %805 = vmatpush1.msra.mxu0 0.0
        %806 = vmatprep.subr.mxu0 0.0
        %807 = vmatpush1.msra.mxu0 0.0
        %808 = vmatprep.subr.mxu0 0.0
        %809 = vmatpush1.msra.mxu0 0.0
        %810 = vmatprep.subr.mxu0 0.0
        %811 = vmatpush1.msra.mxu0 0.0
        %812 = vmatprep.subr.mxu0 0.0
        %813 = vmatpush1.msra.mxu0 0.0
        %814 = vmatprep.subr.mxu0 0.0
        %815 = vmatpush1.msra.mxu0 0.0
        %816 = vmatprep.subr.mxu0 0.0
        %817 = vmatpush1.msra.mxu0 0.0
        %818 = vmatprep.subr.mxu0 0.0
        %819 = vmatpush1.msra.mxu0 0.0
        %820 = vmatprep.subr.mxu0 0.0
        %821 = vmatpush1.msra.mxu0 0.0
        %822 = vmatprep.subr.mxu0 0.0
        %823 = vmatpush1.msra.mxu0 0.0
        %824 = vmatprep.subr.mxu0 0.0
        %825 = vmatpush1.msra.mxu0 0.0
        %826 = vmatprep.subr.mxu0 0.0
        %827 = vmatpush1.msra.mxu0 0.0
        %828 = vmatprep.subr.mxu0 0.0
        %829 = vmatpush1.msra.mxu0 0.0
        %830 = vmatprep.subr.mxu0 0.0
        %831 = vmatpush1.msra.mxu0 0.0
        %832 = vmatprep.subr.mxu0 0.0
        %833 = vmatpush1.msra.mxu0 0.0
        %834 = vmatprep.subr.mxu0 0.0
        %835 = vmatpush1.msra.mxu0 0.0
        %836 = vmatprep.subr.mxu0 0.0
        %837 = vmatpush1.msra.mxu0 0.0
        %838 = vmatprep.subr.mxu0 0.0
        %839 = vmatpush1.msra.mxu0 0.0
        %840 = vmatprep.subr.mxu0 0.0
        %841 = vmatpush1.msra.mxu0 0.0
        %842 = vmatprep.subr.mxu0 0.0
        %843 = vmatpush1.msra.mxu0 0.0
        %844 = vmatprep.subr.mxu0 0.0
        %845 = vmatpush1.msra.mxu0 0.0
        %846 = vmatprep.subr.mxu0 0.0
        %847 = vmatpush1.msra.mxu0 0.0
        %848 = vmatprep.subr.mxu0 0.0
        %849 = vmatpush1.msra.mxu0 0.0
        %850 = vmatprep.subr.mxu0 0.0
        %851 = vmatpush1.msra.mxu0 0.0
        %852 = vmatprep.subr.mxu0 0.0
        %853 = vmatpush1.msra.mxu0 0.0
        %854 = vmatprep.subr.mxu0 0.0
        %855 = vmatpush1.msra.mxu0 0.0
        %856 = vmatprep.subr.mxu0 0.0
        %857 = vmatpush1.msra.mxu0 0.0
        %858 = vmatprep.subr.mxu0 0.0
        %859 = vmatpush1.msra.mxu0 0.0
        %860 = vmatprep.subr.mxu0 0.0
        %861 = vmatpush1.msra.mxu0 0.0
        %862 = vmatprep.mubr.f32.mxu0 0.0
        %863 = vmatmul.mubr.f32.gmra.mrb[0].mxu0 %v793
        %v864 = vpop.f32.mrb[0].mxu0
        %v865 = vadd.f32 0.0, %v864
        %v866 = vpop.f32.mrb[0].mxu0
        %867 = vmatprep.mubr.f32.mxu0 0.0
        %868 = vmatmul.mubr.f32.gmra.mrb[0].mxu0 %v796
        %v869 = vpop.f32.mrb[0].mxu0
        %v870 = vadd.f32 0.0, %v869
        %v871 = vpop.f32.mrb[0].mxu0
        %872 = vdwg.mxu0
        %v873 = vsub.f32 %v701, %v782
        %v874 = vsub.f32 %v706, %v787
        %v875 = vsub.f32 %v865, %v701
        %v876 = vsub.f32 %v870, %v706
        %v877 = vsub.f32 %v875, %v782
        %v878 = vsub.f32 %v876, %v787
        %v879 = vld [vmem:[%s304] sm:$0xff]
        %v880 = vld [vmem:[%s304 + $0x8] sm:$0xff]
        %v881 = vld [vmem:[%s295] sm:$0xff]
        %v882 = vld [vmem:[%s295 + $0x8] sm:$0xff]
        %s883 = scalar_lea.vmem %s295, 16 [#allocation5]
        %v884 = vld [vmem:[%s883] sm:$0xff]
        %v885 = vld [vmem:[%s883 + $0x8] sm:$0xff]
        %v886 = vsub.f32 %v881, %v873
        %v887 = vsub.f32 %v882, %v874
        %v888 = vmul.f32 %v879, %v886
        %v889 = vmul.f32 %v880, %v887
        %v890 = vadd.f32 %v873, %v888
        %v891 = vadd.f32 %v874, %v889
        %v892 = vsub.f32 %v884, %v877
        %v893 = vsub.f32 %v885, %v878
        %v894 = vmul.f32 %v879, %v892
        %v895 = vmul.f32 %v880, %v893
        %v896 = vadd.f32 %v877, %v894
        %v897 = vadd.f32 %v878, %v895
        %898 = vmatprep.subr.mxu0 0.0
        %899 = vmatpush1.msra.mxu0 %v890
        %900 = vmatprep.subr.mxu0 0.0
        %901 = vmatpush1.msra.mxu0 %v891
        %902 = vmatprep.subr.mxu0 0.0
        %903 = vmatpush1.msra.mxu0 0.0
        %904 = vmatprep.subr.mxu0 0.0
        %905 = vmatpush1.msra.mxu0 0.0
        %906 = vmatprep.subr.mxu0 0.0
        %907 = vmatpush1.msra.mxu0 0.0
        %908 = vmatprep.subr.mxu0 0.0
        %909 = vmatpush1.msra.mxu0 0.0
        %910 = vmatprep.subr.mxu0 0.0
        %911 = vmatpush1.msra.mxu0 0.0
        %912 = vmatprep.subr.mxu0 0.0
        %913 = vmatpush1.msra.mxu0 0.0
        %914 = vmatprep.subr.mxu0 0.0
        %915 = vmatpush1.msra.mxu0 0.0
        %916 = vmatprep.subr.mxu0 0.0
        %917 = vmatpush1.msra.mxu0 0.0
        %918 = vmatprep.subr.mxu0 0.0
        %919 = vmatpush1.msra.mxu0 0.0
        %920 = vmatprep.subr.mxu0 0.0
        %921 = vmatpush1.msra.mxu0 0.0
        %922 = vmatprep.subr.mxu0 0.0
        %923 = vmatpush1.msra.mxu0 0.0
        %924 = vmatprep.subr.mxu0 0.0
        %925 = vmatpush1.msra.mxu0 0.0
        %926 = vmatprep.subr.mxu0 0.0
        %927 = vmatpush1.msra.mxu0 0.0
        %928 = vmatprep.subr.mxu0 0.0
        %929 = vmatpush1.msra.mxu0 0.0
        %930 = vmatprep.subr.mxu0 0.0
        %931 = vmatpush1.msra.mxu0 0.0
        %932 = vmatprep.subr.mxu0 0.0
        %933 = vmatpush1.msra.mxu0 0.0
        %934 = vmatprep.subr.mxu0 0.0
        %935 = vmatpush1.msra.mxu0 0.0
        %936 = vmatprep.subr.mxu0 0.0
        %937 = vmatpush1.msra.mxu0 0.0
        %938 = vmatprep.subr.mxu0 0.0
        %939 = vmatpush1.msra.mxu0 0.0
        %940 = vmatprep.subr.mxu0 0.0
        %941 = vmatpush1.msra.mxu0 0.0
        %942 = vmatprep.subr.mxu0 0.0
        %943 = vmatpush1.msra.mxu0 0.0
        %944 = vmatprep.subr.mxu0 0.0
        %945 = vmatpush1.msra.mxu0 0.0
        %946 = vmatprep.subr.mxu0 0.0
        %947 = vmatpush1.msra.mxu0 0.0
        %948 = vmatprep.subr.mxu0 0.0
        %949 = vmatpush1.msra.mxu0 0.0
        %950 = vmatprep.subr.mxu0 0.0
        %951 = vmatpush1.msra.mxu0 0.0
        %952 = vmatprep.subr.mxu0 0.0
        %953 = vmatpush1.msra.mxu0 0.0
        %954 = vmatprep.subr.mxu0 0.0
        %955 = vmatpush1.msra.mxu0 0.0
        %956 = vmatprep.subr.mxu0 0.0
        %957 = vmatpush1.msra.mxu0 0.0
        %958 = vmatprep.subr.mxu0 0.0
        %959 = vmatpush1.msra.mxu0 0.0
        %960 = vmatprep.subr.mxu0 0.0
        %961 = vmatpush1.msra.mxu0 0.0
        %962 = vmatprep.mubr.f32.mxu0 0.0
        %963 = vmatmul.mubr.f32.gmra.mrb[0].mxu0 %v378
        %v964 = vpop.f32.mrb[0].mxu0
        %v965 = vadd.f32 0.0, %v964
        %v966 = vpop.f32.mrb[0].mxu0
        %967 = vmatprep.mubr.f32.mxu0 0.0
        %968 = vmatmul.mubr.f32.gmra.mrb[0].mxu0 %v381
        %v969 = vpop.f32.mrb[0].mxu0
        %v970 = vadd.f32 0.0, %v969
        %v971 = vpop.f32.mrb[0].mxu0
        %972 = vdwg.mxu0
        %973 = vmatprep.subr.mxu0 0.0
        %974 = vmatpush1.msra.mxu0 %v896
        %975 = vmatprep.subr.mxu0 0.0
        %976 = vmatpush1.msra.mxu0 %v897
        %977 = vmatprep.subr.mxu0 0.0
        %978 = vmatpush1.msra.mxu0 0.0
        %979 = vmatprep.subr.mxu0 0.0
        %980 = vmatpush1.msra.mxu0 0.0
        %981 = vmatprep.subr.mxu0 0.0
        %982 = vmatpush1.msra.mxu0 0.0
        %983 = vmatprep.subr.mxu0 0.0
        %984 = vmatpush1.msra.mxu0 0.0
        %985 = vmatprep.subr.mxu0 0.0
        %986 = vmatpush1.msra.mxu0 0.0
        %987 = vmatprep.subr.mxu0 0.0
        %988 = vmatpush1.msra.mxu0 0.0
        %989 = vmatprep.subr.mxu0 0.0
        %990 = vmatpush1.msra.mxu0 0.0
        %991 = vmatprep.subr.mxu0 0.0
        %992 = vmatpush1.msra.mxu0 0.0
        %993 = vmatprep.subr.mxu0 0.0
        %994 = vmatpush1.msra.mxu0 0.0
        %995 = vmatprep.subr.mxu0 0.0
        %996 = vmatpush1.msra.mxu0 0.0
        %997 = vmatprep.subr.mxu0 0.0
        %998 = vmatpush1.msra.mxu0 0.0
        %999 = vmatprep.subr.mxu0 0.0
        %1000 = vmatpush1.msra.mxu0 0.0
        %1001 = vmatprep.subr.mxu0 0.0
        %1002 = vmatpush1.msra.mxu0 0.0
        %1003 = vmatprep.subr.mxu0 0.0
        %1004 = vmatpush1.msra.mxu0 0.0
        %1005 = vmatprep.subr.mxu0 0.0
        %1006 = vmatpush1.msra.mxu0 0.0
        %1007 = vmatprep.subr.mxu0 0.0
        %1008 = vmatpush1.msra.mxu0 0.0
        %1009 = vmatprep.subr.mxu0 0.0
        %1010 = vmatpush1.msra.mxu0 0.0
        %1011 = vmatprep.subr.mxu0 0.0
        %1012 = vmatpush1.msra.mxu0 0.0
        %1013 = vmatprep.subr.mxu0 0.0
        %1014 = vmatpush1.msra.mxu0 0.0
        %1015 = vmatprep.subr.mxu0 0.0
        %1016 = vmatpush1.msra.mxu0 0.0
        %1017 = vmatprep.subr.mxu0 0.0
        %1018 = vmatpush1.msra.mxu0 0.0
        %1019 = vmatprep.subr.mxu0 0.0
        %1020 = vmatpush1.msra.mxu0 0.0
        %1021 = vmatprep.subr.mxu0 0.0
        %1022 = vmatpush1.msra.mxu0 0.0
        %1023 = vmatprep.subr.mxu0 0.0
        %1024 = vmatpush1.msra.mxu0 0.0
        %1025 = vmatprep.subr.mxu0 0.0
        %1026 = vmatpush1.msra.mxu0 0.0
        %1027 = vmatprep.subr.mxu0 0.0
        %1028 = vmatpush1.msra.mxu0 0.0
        %1029 = vmatprep.subr.mxu0 0.0
        %1030 = vmatpush1.msra.mxu0 0.0
        %1031 = vmatprep.subr.mxu0 0.0
        %1032 = vmatpush1.msra.mxu0 0.0
        %1033 = vmatprep.subr.mxu0 0.0
        %1034 = vmatpush1.msra.mxu0 0.0
        %1035 = vmatprep.subr.mxu0 0.0
        %1036 = vmatpush1.msra.mxu0 0.0
        %1037 = vmatprep.mubr.f32.mxu0 0.0
        %1038 = vmatmul.mubr.f32.gmra.mrb[0].mxu0 %v459
        %v1039 = vpop.f32.mrb[0].mxu0
        %v1040 = vadd.f32 0.0, %v1039
        %v1041 = vpop.f32.mrb[0].mxu0
        %1042 = vmatprep.mubr.f32.mxu0 0.0
        %1043 = vmatmul.mubr.f32.gmra.mrb[0].mxu0 %v462
        %v1044 = vpop.f32.mrb[0].mxu0
        %v1045 = vadd.f32 0.0, %v1044
        %v1046 = vpop.f32.mrb[0].mxu0
        %1047 = vdwg.mxu0
        %v1048 = vadd.f32 %v890, %v896
        %v1049 = vadd.f32 %v891, %v897
        %v1051 = vsel %vm376, %v358, 0
        %v1054 = vsel %vm376, %v359, 0
        %1056 = vmatprep.subr.mxu0 0.0
        %1057 = vmatpush1.msra.mxu0 %v1048
        %1058 = vmatprep.subr.mxu0 0.0
        %1059 = vmatpush1.msra.mxu0 %v1049
        %1060 = vmatprep.subr.mxu0 0.0
        %1061 = vmatpush1.msra.mxu0 0.0
        %1062 = vmatprep.subr.mxu0 0.0
        %1063 = vmatpush1.msra.mxu0 0.0
        %1064 = vmatprep.subr.mxu0 0.0
        %1065 = vmatpush1.msra.mxu0 0.0
        %1066 = vmatprep.subr.mxu0 0.0
        %1067 = vmatpush1.msra.mxu0 0.0
        %1068 = vmatprep.subr.mxu0 0.0
        %1069 = vmatpush1.msra.mxu0 0.0
        %1070 = vmatprep.subr.mxu0 0.0
        %1071 = vmatpush1.msra.mxu0 0.0
        %1072 = vmatprep.subr.mxu0 0.0
        %1073 = vmatpush1.msra.mxu0 0.0
        %1074 = vmatprep.subr.mxu0 0.0
        %1075 = vmatpush1.msra.mxu0 0.0
        %1076 = vmatprep.subr.mxu0 0.0
        %1077 = vmatpush1.msra.mxu0 0.0
        %1078 = vmatprep.subr.mxu0 0.0
        %1079 = vmatpush1.msra.mxu0 0.0
        %1080 = vmatprep.subr.mxu0 0.0
        %1081 = vmatpush1.msra.mxu0 0.0
        %1082 = vmatprep.subr.mxu0 0.0
        %1083 = vmatpush1.msra.mxu0 0.0
        %1084 = vmatprep.subr.mxu0 0.0
        %1085 = vmatpush1.msra.mxu0 0.0
        %1086 = vmatprep.subr.mxu0 0.0
        %1087 = vmatpush1.msra.mxu0 0.0
        %1088 = vmatprep.subr.mxu0 0.0
        %1089 = vmatpush1.msra.mxu0 0.0
        %1090 = vmatprep.subr.mxu0 0.0
        %1091 = vmatpush1.msra.mxu0 0.0
        %1092 = vmatprep.subr.mxu0 0.0
        %1093 = vmatpush1.msra.mxu0 0.0
        %1094 = vmatprep.subr.mxu0 0.0
        %1095 = vmatpush1.msra.mxu0 0.0
        %1096 = vmatprep.subr.mxu0 0.0
        %1097 = vmatpush1.msra.mxu0 0.0
        %1098 = vmatprep.subr.mxu0 0.0
        %1099 = vmatpush1.msra.mxu0 0.0
        %1100 = vmatprep.subr.mxu0 0.0
        %1101 = vmatpush1.msra.mxu0 0.0
        %1102 = vmatprep.subr.mxu0 0.0
        %1103 = vmatpush1.msra.mxu0 0.0
        %1104 = vmatprep.subr.mxu0 0.0
        %1105 = vmatpush1.msra.mxu0 0.0
        %1106 = vmatprep.subr.mxu0 0.0
        %1107 = vmatpush1.msra.mxu0 0.0
        %1108 = vmatprep.subr.mxu0 0.0
        %1109 = vmatpush1.msra.mxu0 0.0
        %1110 = vmatprep.subr.mxu0 0.0
        %1111 = vmatpush1.msra.mxu0 0.0
        %1112 = vmatprep.subr.mxu0 0.0
        %1113 = vmatpush1.msra.mxu0 0.0
        %1114 = vmatprep.subr.mxu0 0.0
        %1115 = vmatpush1.msra.mxu0 0.0
        %1116 = vmatprep.subr.mxu0 0.0
        %1117 = vmatpush1.msra.mxu0 0.0
        %1118 = vmatprep.subr.mxu0 0.0
        %1119 = vmatpush1.msra.mxu0 0.0
        %1120 = vmatprep.mubr.f32.mxu0 0.0
        %1121 = vmatmul.mubr.f32.gmra.mrb[0].mxu0 %v1051
        %v1122 = vpop.f32.mrb[0].mxu0
        %v1123 = vadd.f32 0.0, %v1122
        %v1124 = vpop.f32.mrb[0].mxu0
        %1125 = vmatprep.mubr.f32.mxu0 0.0
        %1126 = vmatmul.mubr.f32.gmra.mrb[0].mxu0 %v1054
        %v1127 = vpop.f32.mrb[0].mxu0
        %v1128 = vadd.f32 0.0, %v1127
        %v1129 = vpop.f32.mrb[0].mxu0
        %1130 = vdwg.mxu0
        %v1131 = vadd.f32 %v965, %v1040
        %v1132 = vadd.f32 %v970, %v1045
        %v1133 = vsub.f32 %v1123, %v965
        %v1134 = vsub.f32 %v1128, %v970
        %v1135 = vadd.f32 %v1133, %v1040
        %v1136 = vadd.f32 %v1134, %v1045
        %v1138 = vsel %vm376, %v1131, 0
        %v1141 = vsel %vm376, %v1132, 0
        %1143 = vmatprep.subr.mxu0 0.0
        %1144 = vmatpush1.msra.mxu0 %v360
        %1145 = vmatprep.subr.mxu0 0.0
        %1146 = vmatpush1.msra.mxu0 %v361
        %1147 = vmatprep.subr.mxu0 0.0
        %1148 = vmatpush1.msra.mxu0 0.0
        %1149 = vmatprep.subr.mxu0 0.0
        %1150 = vmatpush1.msra.mxu0 0.0
        %1151 = vmatprep.subr.mxu0 0.0
        %1152 = vmatpush1.msra.mxu0 0.0
        %1153 = vmatprep.subr.mxu0 0.0
        %1154 = vmatpush1.msra.mxu0 0.0
        %1155 = vmatprep.subr.mxu0 0.0
        %1156 = vmatpush1.msra.mxu0 0.0
        %1157 = vmatprep.subr.mxu0 0.0
        %1158 = vmatpush1.msra.mxu0 0.0
        %1159 = vmatprep.subr.mxu0 0.0
        %1160 = vmatpush1.msra.mxu0 0.0
        %1161 = vmatprep.subr.mxu0 0.0
        %1162 = vmatpush1.msra.mxu0 0.0
        %1163 = vmatprep.subr.mxu0 0.0
        %1164 = vmatpush1.msra.mxu0 0.0
        %1165 = vmatprep.subr.mxu0 0.0
        %1166 = vmatpush1.msra.mxu0 0.0
        %1167 = vmatprep.subr.mxu0 0.0
        %1168 = vmatpush1.msra.mxu0 0.0
        %1169 = vmatprep.subr.mxu0 0.0
        %1170 = vmatpush1.msra.mxu0 0.0
        %1171 = vmatprep.subr.mxu0 0.0
        %1172 = vmatpush1.msra.mxu0 0.0
        %1173 = vmatprep.subr.mxu0 0.0
        %1174 = vmatpush1.msra.mxu0 0.0
        %1175 = vmatprep.subr.mxu0 0.0
        %1176 = vmatpush1.msra.mxu0 0.0
        %1177 = vmatprep.subr.mxu0 0.0
        %1178 = vmatpush1.msra.mxu0 0.0
        %1179 = vmatprep.subr.mxu0 0.0
        %1180 = vmatpush1.msra.mxu0 0.0
        %1181 = vmatprep.subr.mxu0 0.0
        %1182 = vmatpush1.msra.mxu0 0.0
        %1183 = vmatprep.subr.mxu0 0.0
        %1184 = vmatpush1.msra.mxu0 0.0
        %1185 = vmatprep.subr.mxu0 0.0
        %1186 = vmatpush1.msra.mxu0 0.0
        %1187 = vmatprep.subr.mxu0 0.0
        %1188 = vmatpush1.msra.mxu0 0.0
        %1189 = vmatprep.subr.mxu0 0.0
        %1190 = vmatpush1.msra.mxu0 0.0
        %1191 = vmatprep.subr.mxu0 0.0
        %1192 = vmatpush1.msra.mxu0 0.0
        %1193 = vmatprep.subr.mxu0 0.0
        %1194 = vmatpush1.msra.mxu0 0.0
        %1195 = vmatprep.subr.mxu0 0.0
        %1196 = vmatpush1.msra.mxu0 0.0
        %1197 = vmatprep.subr.mxu0 0.0
        %1198 = vmatpush1.msra.mxu0 0.0
        %1199 = vmatprep.subr.mxu0 0.0
        %1200 = vmatpush1.msra.mxu0 0.0
        %1201 = vmatprep.subr.mxu0 0.0
        %1202 = vmatpush1.msra.mxu0 0.0
        %1203 = vmatprep.subr.mxu0 0.0
        %1204 = vmatpush1.msra.mxu0 0.0
        %1205 = vmatprep.subr.mxu0 0.0
        %1206 = vmatpush1.msra.mxu0 0.0
        %1207 = vmatprep.mubr.f32.mxu0 0.0
        %1208 = vmatmul.mubr.f32.gmra.mrb[0].mxu0 %v1138
        %v1209 = vpop.f32.mrb[0].mxu0
        %v1210 = vadd.f32 0.0, %v1209
        %v1211 = vpop.f32.mrb[0].mxu0
        %1212 = vmatprep.mubr.f32.mxu0 0.0
        %1213 = vmatmul.mubr.f32.gmra.mrb[0].mxu0 %v1141
        %v1214 = vpop.f32.mrb[0].mxu0
        %v1215 = vadd.f32 0.0, %v1214
        %v1216 = vpop.f32.mrb[0].mxu0
        %1217 = vdwg.mxu0
        %v1219 = vsel %vm376, %v1135, 0
        %v1222 = vsel %vm376, %v1136, 0
        %1224 = vmatprep.subr.mxu0 0.0
        %1225 = vmatpush1.msra.mxu0 %v363
        %1226 = vmatprep.subr.mxu0 0.0
        %1227 = vmatpush1.msra.mxu0 %v364
        %1228 = vmatprep.subr.mxu0 0.0
        %1229 = vmatpush1.msra.mxu0 0.0
        %1230 = vmatprep.subr.mxu0 0.0
        %1231 = vmatpush1.msra.mxu0 0.0
        %1232 = vmatprep.subr.mxu0 0.0
        %1233 = vmatpush1.msra.mxu0 0.0
        %1234 = vmatprep.subr.mxu0 0.0
        %1235 = vmatpush1.msra.mxu0 0.0
        %1236 = vmatprep.subr.mxu0 0.0
        %1237 = vmatpush1.msra.mxu0 0.0
        %1238 = vmatprep.subr.mxu0 0.0
        %1239 = vmatpush1.msra.mxu0 0.0
        %1240 = vmatprep.subr.mxu0 0.0
        %1241 = vmatpush1.msra.mxu0 0.0
        %1242 = vmatprep.subr.mxu0 0.0
        %1243 = vmatpush1.msra.mxu0 0.0
        %1244 = vmatprep.subr.mxu0 0.0
        %1245 = vmatpush1.msra.mxu0 0.0
        %1246 = vmatprep.subr.mxu0 0.0
        %1247 = vmatpush1.msra.mxu0 0.0
        %1248 = vmatprep.subr.mxu0 0.0
        %1249 = vmatpush1.msra.mxu0 0.0
        %1250 = vmatprep.subr.mxu0 0.0
        %1251 = vmatpush1.msra.mxu0 0.0
        %1252 = vmatprep.subr.mxu0 0.0
        %1253 = vmatpush1.msra.mxu0 0.0
        %1254 = vmatprep.subr.mxu0 0.0
        %1255 = vmatpush1.msra.mxu0 0.0
        %1256 = vmatprep.subr.mxu0 0.0
        %1257 = vmatpush1.msra.mxu0 0.0
        %1258 = vmatprep.subr.mxu0 0.0
        %1259 = vmatpush1.msra.mxu0 0.0
        %1260 = vmatprep.subr.mxu0 0.0
        %1261 = vmatpush1.msra.mxu0 0.0
        %1262 = vmatprep.subr.mxu0 0.0
        %1263 = vmatpush1.msra.mxu0 0.0
        %1264 = vmatprep.subr.mxu0 0.0
        %1265 = vmatpush1.msra.mxu0 0.0
        %1266 = vmatprep.subr.mxu0 0.0
        %1267 = vmatpush1.msra.mxu0 0.0
        %1268 = vmatprep.subr.mxu0 0.0
        %1269 = vmatpush1.msra.mxu0 0.0
        %1270 = vmatprep.subr.mxu0 0.0
        %1271 = vmatpush1.msra.mxu0 0.0
        %1272 = vmatprep.subr.mxu0 0.0
        %1273 = vmatpush1.msra.mxu0 0.0
        %1274 = vmatprep.subr.mxu0 0.0
        %1275 = vmatpush1.msra.mxu0 0.0
        %1276 = vmatprep.subr.mxu0 0.0
        %1277 = vmatpush1.msra.mxu0 0.0
        %1278 = vmatprep.subr.mxu0 0.0
        %1279 = vmatpush1.msra.mxu0 0.0
        %1280 = vmatprep.subr.mxu0 0.0
        %1281 = vmatpush1.msra.mxu0 0.0
        %1282 = vmatprep.subr.mxu0 0.0
        %1283 = vmatpush1.msra.mxu0 0.0
        %1284 = vmatprep.subr.mxu0 0.0
        %1285 = vmatpush1.msra.mxu0 0.0
        %1286 = vmatprep.subr.mxu0 0.0
        %1287 = vmatpush1.msra.mxu0 0.0
        %1288 = vmatprep.mubr.f32.mxu0 0.0
        %1289 = vmatmul.mubr.f32.gmra.mrb[0].mxu0 %v1219
        %v1290 = vpop.f32.mrb[0].mxu0
        %v1291 = vadd.f32 0.0, %v1290
        %v1292 = vpop.f32.mrb[0].mxu0
        %1293 = vmatprep.mubr.f32.mxu0 0.0
        %1294 = vmatmul.mubr.f32.gmra.mrb[0].mxu0 %v1222
        %v1295 = vpop.f32.mrb[0].mxu0
        %v1296 = vadd.f32 0.0, %v1295
        %v1297 = vpop.f32.mrb[0].mxu0
        %1298 = vdwg.mxu0
        %v1299 = vadd.f32 %v1131, %v1135
        %v1300 = vadd.f32 %v1132, %v1136
        %v1302 = vsel %vm376, %v1299, 0
        %v1305 = vsel %vm376, %v1300, 0
        %1307 = vmatprep.subr.mxu0 0.0
        %1308 = vmatpush1.msra.mxu0 %v369
        %1309 = vmatprep.subr.mxu0 0.0
        %1310 = vmatpush1.msra.mxu0 %v370
        %1311 = vmatprep.subr.mxu0 0.0
        %1312 = vmatpush1.msra.mxu0 0.0
        %1313 = vmatprep.subr.mxu0 0.0
        %1314 = vmatpush1.msra.mxu0 0.0
        %1315 = vmatprep.subr.mxu0 0.0
        %1316 = vmatpush1.msra.mxu0 0.0
        %1317 = vmatprep.subr.mxu0 0.0
        %1318 = vmatpush1.msra.mxu0 0.0
        %1319 = vmatprep.subr.mxu0 0.0
        %1320 = vmatpush1.msra.mxu0 0.0
        %1321 = vmatprep.subr.mxu0 0.0
        %1322 = vmatpush1.msra.mxu0 0.0
        %1323 = vmatprep.subr.mxu0 0.0
        %1324 = vmatpush1.msra.mxu0 0.0
        %1325 = vmatprep.subr.mxu0 0.0
        %1326 = vmatpush1.msra.mxu0 0.0
        %1327 = vmatprep.subr.mxu0 0.0
        %1328 = vmatpush1.msra.mxu0 0.0
        %1329 = vmatprep.subr.mxu0 0.0
        %1330 = vmatpush1.msra.mxu0 0.0
        %1331 = vmatprep.subr.mxu0 0.0
        %1332 = vmatpush1.msra.mxu0 0.0
        %1333 = vmatprep.subr.mxu0 0.0
        %1334 = vmatpush1.msra.mxu0 0.0
        %1335 = vmatprep.subr.mxu0 0.0
        %1336 = vmatpush1.msra.mxu0 0.0
        %1337 = vmatprep.subr.mxu0 0.0
        %1338 = vmatpush1.msra.mxu0 0.0
        %1339 = vmatprep.subr.mxu0 0.0
        %1340 = vmatpush1.msra.mxu0 0.0
        %1341 = vmatprep.subr.mxu0 0.0
        %1342 = vmatpush1.msra.mxu0 0.0
        %1343 = vmatprep.subr.mxu0 0.0
        %1344 = vmatpush1.msra.mxu0 0.0
        %1345 = vmatprep.subr.mxu0 0.0
        %1346 = vmatpush1.msra.mxu0 0.0
        %1347 = vmatprep.subr.mxu0 0.0
        %1348 = vmatpush1.msra.mxu0 0.0
        %1349 = vmatprep.subr.mxu0 0.0
        %1350 = vmatpush1.msra.mxu0 0.0
        %1351 = vmatprep.subr.mxu0 0.0
        %1352 = vmatpush1.msra.mxu0 0.0
        %1353 = vmatprep.subr.mxu0 0.0
        %1354 = vmatpush1.msra.mxu0 0.0
        %1355 = vmatprep.subr.mxu0 0.0
        %1356 = vmatpush1.msra.mxu0 0.0
        %1357 = vmatprep.subr.mxu0 0.0
        %1358 = vmatpush1.msra.mxu0 0.0
        %1359 = vmatprep.subr.mxu0 0.0
        %1360 = vmatpush1.msra.mxu0 0.0
        %1361 = vmatprep.subr.mxu0 0.0
        %1362 = vmatpush1.msra.mxu0 0.0
        %1363 = vmatprep.subr.mxu0 0.0
        %1364 = vmatpush1.msra.mxu0 0.0
        %1365 = vmatprep.subr.mxu0 0.0
        %1366 = vmatpush1.msra.mxu0 0.0
        %1367 = vmatprep.subr.mxu0 0.0
        %1368 = vmatpush1.msra.mxu0 0.0
        %1369 = vmatprep.subr.mxu0 0.0
        %1370 = vmatpush1.msra.mxu0 0.0
        %1371 = vmatprep.mubr.f32.mxu0 0.0
        %1372 = vmatmul.mubr.f32.gmra.mrb[0].mxu0 %v1302
        %v1373 = vpop.f32.mrb[0].mxu0
        %v1374 = vadd.f32 0.0, %v1373
        %v1375 = vpop.f32.mrb[0].mxu0
        %1376 = vmatprep.mubr.f32.mxu0 0.0
        %1377 = vmatmul.mubr.f32.gmra.mrb[0].mxu0 %v1305
        %v1378 = vpop.f32.mrb[0].mxu0
        %v1379 = vadd.f32 0.0, %v1378
        %v1380 = vpop.f32.mrb[0].mxu0
        %1381 = vdwg.mxu0
        %v1382 = vadd.f32 %v1210, %v1291
        %v1383 = vadd.f32 %v1215, %v1296
        %1384 = vst.msk [vmem:[%s348] sm:$0xff] %vm376, %v1382
        %1385 = vst.msk [vmem:[%s348 + $0x8] sm:$0xff] %vm376, %v1383
        %v1386 = vsub.f32 %v1374, %v1210
        %v1387 = vsub.f32 %v1379, %v1215
        %v1388 = vadd.f32 %v1386, %v1291
        %v1389 = vadd.f32 %v1387, %v1296
        %s1390 = scalar_lea.vmem %s348, 16 [#allocation11]
        %1391 = vst.msk [vmem:[%s1390] sm:$0xff] %vm376, %v1388
        %1392 = vst.msk [vmem:[%s1390 + $0x8] sm:$0xff] %vm376, %v1389
        %s1393 = sand.u32 %s154, 1
        %s1394 = scalar_lea.sflag [#allocation4], %s1393
        %s1395 = sand.u32 %s154, 1
        %s1396 = smul.addr %s1395, 32
        %s1397 = scalar_lea.vmem [#allocation11], %s1396
        // Predicated region
        $region61: #{tpu_custom_call.1} parent=39 // pred_check
          %p1398 = pneg %p164
        $region62: #{tpu_custom_call.1} parent=39 // pred_check_branch
          %1400 = sbr.rel (%p1398) target = $region64
        $region63: #{tpu_custom_call.1} parent=39 // pred_region
          %s1402 = ssub.s32 512, 512
          %1403 = vsyncadd %s1394, %s1402
          %s1404 = smul.addr %s26, 4
          %s1405 = smul.addr %s1404, 128
          %s1406 = scalar_lea.hbm %s5, %s1405
          %s1407 = sshll.u32 %s1397, 4
          %s1408 = int_to_ptr.vmem [resolvable:$true] %s1407
          %1413 = dma.vmem_to_hbm [thread:$0]  %s1408, 512, %s1406, %s1394, 128, 128, 8
        $region64: #{tpu_custom_call.1} parent=39 // pred_fallthru
          _
      $region40: #{tpu_custom_call.1} parent=5 // pred_fallthru
        _
      %p1414 = scmp.le.s32.totalorder 2, %s21
      // Predicated region
      $region65: #{tpu_custom_call.1} parent=5 // pred_check
        %p1415 = pneg %p1414
      $region66: #{tpu_custom_call.1} parent=5 // pred_check_branch
        %1417 = sbr.rel (%p1415) target = $region68
      $region67: #{tpu_custom_call.1} parent=5 // pred_region
        %s1418 = ssub.s32 %s21, 2
        // Predicated region
        $region69: #{tpu_custom_call.1} parent=67 // pred_check
          %p1419 = pneg %p170
        $region70: #{tpu_custom_call.1} parent=67 // pred_check_branch
          %1421 = sbr.rel (%p1419) target = $region72
        $region71: #{tpu_custom_call.1} parent=67 // pred_region
          %s1422 = sand.u32 %s155, 1
          %s1423 = scalar_lea.sflag [#allocation4], %s1422
          %s1424 = sand.u32 %s155, 1
          %s1425 = smul.addr %s1424, 32
          %s1426 = scalar_lea.vmem [#allocation11], %s1425
          %1427 = dma.done %s1423, 512
        $region72: #{tpu_custom_call.1} parent=67 // pred_fallthru
          _
      $region68: #{tpu_custom_call.1} parent=5 // pred_fallthru
        _
    $region6: #{tpu_custom_call.1} parent=1 // loop_footer
      %s25 = sadd.s32 1, %s21
    $region7: #{tpu_custom_call.1} parent=1 // loop_footer_branch
      %20 = sbr.rel target = $region3
    $region8: #{tpu_custom_call.1} parent=1 // loop_exit
      _
    %1428 = vsyncpa [#allocation3], 1
    %s1429 = scalar_lea.sflag [#allocation3], 1
    %1430 = vsyncpa %s1429, 1
    %1431 = vsyncpa [#allocation6], 1
    %s1432 = scalar_lea.sflag [#allocation6], 1
    %1433 = vsyncpa %s1432, 1
    %1434 = vsyncpa [#allocation9], 1
    %1435 = vsyncpa [#allocation4], 1
    %s1436 = scalar_lea.sflag [#allocation4], 1
    %1437 = vsyncpa %s1436, 1

</llo_original>
